<compile_context>
chip_gen: v7x
topology: tpu7x:2x2x1
jax: 0.10.0
libtpu: 0.0.40
codegen_flags: <defaults>
</compile_context>

<pallas_src>
import functools

import jax
import jax.numpy as jnp
from jax.experimental import pallas as pl
from jax.experimental.pallas import tpu as pltpu


def _round_up(x: int, m: int) -> int:
    return (x + m - 1) // m * m


def _choose_tb(batch: int, block_batch: int) -> int:
    """Batch tile: multiple of 256 (feeds the 256-tall MXU and amortizes the
    ~0.35us per-grid-step overhead), aiming for >=2 grid steps so v7x's two
    TensorCores both get work; capped at block_batch."""
    block_batch = max(256, _round_up(block_batch, 256))
    per_core = _round_up(pl.cdiv(batch, 2), 256)   # split across 2 TCs when possible
    return max(256, min(block_batch, per_core))


def _vmem_limit_bytes(per_step_bytes: int) -> int:
    """Generation-aware scoped-VMEM limit: pipeline working set + headroom,
    clamped below physical VMEM (64 MiB on v7x, 128 MiB on v5e/v6e)."""
    cap = 64 * 1024 * 1024  # conservative default if the query is unavailable
    try:
        cap = int(pltpu.get_tpu_info().vmem_capacity_bytes)
    except Exception:
        pass
    want = per_step_bytes + (8 << 20)              # headroom for compiler temps
    return int(min(max(want, 32 << 20), cap - (8 << 20)))


def _policy_kernel(x_ref, w1_ref, b1_ref, w2_ref, b2_ref, w3_ref, b3_ref,
                   out_ref, *, action_dim: int):
    # x tile: (TB, state_dim) bf16 (cast in wrapper). Weights bf16, biases f32,
    # all VMEM-resident across the whole grid.
    x = x_ref[...]

    # Layer 1: Linear + ReLU (bf16 MXU inputs, f32 accumulate).
    h1 = jnp.dot(x, w1_ref[...], preferred_element_type=jnp.float32) + b1_ref[...]
    h1 = jnp.maximum(h1, 0.0)

    # Layer 2: Linear + ReLU.
    h2 = jnp.dot(h1.astype(jnp.bfloat16), w2_ref[...],
                 preferred_element_type=jnp.float32) + b2_ref[...]
    h2 = jnp.maximum(h2, 0.0)

    # Layer 3: Linear (logits).
    logits = jnp.dot(h2.astype(jnp.bfloat16), w3_ref[...],
                     preferred_element_type=jnp.float32) + b3_ref[...]

    # Mask lane-padding columns so they get (numerically) zero probability.
    a_pad = logits.shape[-1]
    if a_pad != action_dim:
        col = jax.lax.broadcasted_iota(jnp.int32, logits.shape, 1)
        logits = jnp.where(col < action_dim, logits, -1e30)

    # Numerically-stable softmax. Exact reciprocal on the (TB, 1) denominator
    # (cheap) so probabilities sum to 1 to f32 precision.
    m = jnp.max(logits, axis=-1, keepdims=True)
    e = jnp.exp(logits - m)
    inv = pl.reciprocal(jnp.sum(e, axis=-1, keepdims=True))
    probs = e * inv

    out_w = out_ref.shape[-1]          # a_pad (lane-dense) or action_dim (narrow)
    out_ref[...] = probs[:, :out_w].astype(out_ref.dtype)


def prepare_params(params):
    """Hoisted (per perf review): pad hidden/action dims to lane multiples and
    cast weights to bf16 ONCE, outside the forward hot path. Zero padding keeps
    the ReLU layers exact; padded logit lanes are masked in-kernel."""
    w1, b1 = params["w1"], params["b1"]
    w2, b2 = params["w2"], params["b2"]
    w3, b3 = params["w3"], params["b3"]
    state_dim, hidden = w1.shape
    action_dim = w3.shape[1]
    h_pad = _round_up(hidden, 128)
    a_pad = _round_up(action_dim, 128)

    def padw(w, rows, cols):
        return jnp.pad(w, ((0, rows - w.shape[0]),
                           (0, cols - w.shape[1]))).astype(jnp.bfloat16)

    def padb(b, cols):
        b = b.reshape(1, -1)
        return jnp.pad(b, ((0, 0), (0, cols - b.shape[1]))).astype(jnp.float32)

    return {
        "w1": padw(w1, state_dim, h_pad), "b1": padb(b1, h_pad),
        "w2": padw(w2, h_pad, h_pad),     "b2": padb(b2, h_pad),
        "w3": padw(w3, h_pad, a_pad),     "b3": padb(b3, a_pad),
        "state_dim": state_dim, "hidden": hidden, "action_dim": action_dim,
        "h_pad": h_pad, "a_pad": a_pad,
    }


def policy_network_forward(x, prepared, *, block_batch: int = 2048,
                           lane_dense_out: bool = True):
    """x: (batch, state_dim) float32; prepared: output of prepare_params()."""
    batch, state_dim = x.shape
    assert state_dim == prepared["state_dim"]
    h_pad, a_pad = prepared["h_pad"], prepared["a_pad"]
    action_dim = prepared["action_dim"]

    # Batch tiling (multiple of 256, >=2 steps for mid-size batches on v7x).
    tb = _choose_tb(batch, block_batch)
    batch_pad = _round_up(batch, tb)
    xp = jnp.pad(x.astype(jnp.bfloat16), ((0, batch_pad - batch), (0, 0)))

    # Lane-dense padded output (default) or narrow unpadded output (v5e option:
    # trades masked stores for ~32x fewer writeback bytes).
    out_w = a_pad if lane_dense_out else action_dim
    grid = (batch_pad // tb,)

    kernel = functools.partial(_policy_kernel, action_dim=action_dim)
    w_shapes = [(state_dim, h_pad), (1, h_pad),
                (h_pad, h_pad),     (1, h_pad),
                (h_pad, a_pad),     (1, a_pad)]

    # Scoped-VMEM limit: double-buffered streamed tiles + weights (counted at
    # 2 buffers to stay safe on the fallback path) + headroom.
    tile_bytes = tb * state_dim * 2 + tb * out_w * 4
    weight_bytes = sum(int(prepared[k].size) * prepared[k].dtype.itemsize
                       for k in ("w1", "b1", "w2", "b2", "w3", "b3"))
    vmem_limit = _vmem_limit_bytes(2 * tile_bytes + 2 * weight_bytes)

    def run(single_buffer_weights: bool):
        if single_buffer_weights:
            # Constant index_map -> no pipelining needed; single buffer halves
            # the resident-weight VMEM footprint (matters once hidden grows,
            # especially under v7x's 64 MiB VMEM).
            resident = lambda s: pl.BlockSpec(s, lambda i: (0, 0),
                                              pipeline_mode=pl.Buffered(1))
        else:
            resident = lambda s: pl.BlockSpec(s, lambda i: (0, 0))

        return pl.pallas_call(
            kernel,
            out_shape=jax.ShapeDtypeStruct((batch_pad, out_w), jnp.float32),
            grid=grid,
            in_specs=[pl.BlockSpec((tb, state_dim), lambda i: (i, 0))]  # x: streamed
                     + [resident(s) for s in w_shapes],                 # weights/biases
            out_specs=pl.BlockSpec((tb, out_w), lambda i: (i, 0)),
            compiler_params=pltpu.CompilerParams(
                dimension_semantics=("parallel",),   # shard grid across v7x's 2 TCs
                vmem_limit_bytes=vmem_limit,
            ),
        )(xp, prepared["w1"], prepared["b1"], prepared["w2"], prepared["b2"],
          prepared["w3"], prepared["b3"])

    # NOTE: fallback only triggers eagerly (not under an outer jit); the
    # double-buffered path is the previously-verified working configuration.
    try:
        out = run(True)
    except Exception:
        out = run(False)

    return out[:batch, :action_dim]


def init_params(key, state_dim, action_dim, hidden_dim):
    """Deterministic synthetic init (uniform, Kaiming-ish scale like nn.Linear).
    Weights stored (in, out), i.e. transposed vs. torch nn.Linear."""
    ks = jax.random.split(key, 6)

    def lin(kw, kb, fan_in, fan_out):
        bound = 1.0 / jnp.sqrt(fan_in)
        w = jax.random.uniform(kw, (fan_in, fan_out), jnp.float32, -bound, bound)
        b = jax.random.uniform(kb, (1, fan_out), jnp.float32, -bound, bound)
        return w, b

    w1, b1 = lin(ks[0], ks[1], state_dim, hidden_dim)
    w2, b2 = lin(ks[2], ks[3], hidden_dim, hidden_dim)
    w3, b3 = lin(ks[4], ks[5], hidden_dim, action_dim)
    return {"w1": w1, "b1": b1, "w2": w2, "b2": b2, "w3": w3, "b3": b3}


def _reference_forward(x, params):
    """Plain-JAX reference using the same bf16 matmul inputs / f32 accumulation."""
    bf = jnp.bfloat16
    h1 = jnp.maximum(jnp.dot(x.astype(bf), params["w1"].astype(bf),
                             preferred_element_type=jnp.float32) + params["b1"], 0.0)
    h2 = jnp.maximum(jnp.dot(h1.astype(bf), params["w2"].astype(bf),
                             preferred_element_type=jnp.float32) + params["b2"], 0.0)
    logits = jnp.dot(h2.astype(bf), params["w3"].astype(bf),
                     preferred_element_type=jnp.float32) + params["b3"]
    return jax.nn.softmax(logits, axis=-1)


if __name__ == "__main__":
    key = jax.random.PRNGKey(0)
    k_params, k_x = jax.random.split(key)

    # Small shapes consistent with the module (hidden_dim default = 128).
    batch, state_dim, hidden_dim, action_dim = 2, 8, 128, 4
    params = init_params(k_params, state_dim, action_dim, hidden_dim)
    prepared = prepare_params(params)   # pad + bf16 cast hoisted out of forward
    x = jax.random.normal(k_x, (batch, state_dim), jnp.float32)

    probs = policy_network_forward(x, prepared)
    probs = jax.block_until_ready(probs)

    ref = _reference_forward(x, params)
    assert probs.shape == (batch, action_dim)
    assert jnp.allclose(probs, ref, atol=5e-3), "mismatch vs reference"
    assert jnp.allclose(jnp.sum(probs, axis=-1), 1.0, atol=1e-3)

    print("KERNEL_OK")
</pallas_src>

<mosaic_0001>
module attributes {stable_mosaic.version = 11 : i64} {
  func.func @_policy_kernel(%arg0: i32, %arg1: memref<256x8xbf16, #tpu.memory_space<vmem>>, %arg2: memref<8x128xbf16, #tpu.memory_space<vmem>>, %arg3: memref<1x128xf32, #tpu.memory_space<vmem>>, %arg4: memref<128x128xbf16, #tpu.memory_space<vmem>>, %arg5: memref<1x128xf32, #tpu.memory_space<vmem>>, %arg6: memref<128x128xbf16, #tpu.memory_space<vmem>>, %arg7: memref<1x128xf32, #tpu.memory_space<vmem>>, %arg8: memref<256x128xf32, #tpu.memory_space<vmem>>) attributes {dimension_semantics = [#tpu.dimension_semantics<parallel>], iteration_bounds = array<i64: 1>, scalar_prefetch = 0 : i64, scratch_operands = 0 : i64, tpu.core_type = #tpu.core_type<tc>, window_params = [{transform_indices = @transform_0, window_bounds = array<i64: 256, 8>}, {pipeline_mode = #tpu.pipeline_mode<synchronous>, transform_indices = @transform_1, window_bounds = array<i64: 8, 128>}, {pipeline_mode = #tpu.pipeline_mode<synchronous>, transform_indices = @transform_2, window_bounds = array<i64: 1, 128>}, {pipeline_mode = #tpu.pipeline_mode<synchronous>, transform_indices = @transform_3, window_bounds = array<i64: 128, 128>}, {pipeline_mode = #tpu.pipeline_mode<synchronous>, transform_indices = @transform_4, window_bounds = array<i64: 1, 128>}, {pipeline_mode = #tpu.pipeline_mode<synchronous>, transform_indices = @transform_5, window_bounds = array<i64: 128, 128>}, {pipeline_mode = #tpu.pipeline_mode<synchronous>, transform_indices = @transform_6, window_bounds = array<i64: 1, 128>}, {transform_indices = @transform_7, window_bounds = array<i64: 256, 128>}]} {
    %c0 = arith.constant 0 : index
    %c0_0 = arith.constant 0 : index
    %0 = vector.load %arg1[%c0, %c0_0] : memref<256x8xbf16, #tpu.memory_space<vmem>>, vector<256x8xbf16>
    %c0_1 = arith.constant 0 : index
    %c0_2 = arith.constant 0 : index
    %1 = vector.load %arg2[%c0_1, %c0_2] : memref<8x128xbf16, #tpu.memory_space<vmem>>, vector<8x128xbf16>
    %cst = arith.constant dense<0.000000e+00> : vector<256x128xf32>
    %2 = tpu.matmul %0, %1, %cst {dimension_numbers = #tpu.dot_dimension_numbers<[1], [0], [0], [1], [0, 0, 1, 1], [], []>} : vector<256x8xbf16>, vector<8x128xbf16>, vector<256x128xf32> -> vector<256x128xf32>
    %c0_3 = arith.constant 0 : index
    %c0_4 = arith.constant 0 : index
    %3 = vector.load %arg3[%c0_3, %c0_4] : memref<1x128xf32, #tpu.memory_space<vmem>>, vector<1x128xf32>
    %4 = vector.broadcast %3 : vector<1x128xf32> to vector<256x128xf32>
    %5 = arith.addf %2, %4 : vector<256x128xf32>
    %cst_5 = arith.constant 0.000000e+00 : f32
    %6 = vector.broadcast %cst_5 : f32 to vector<256x128xf32>
    %7 = arith.maximumf %5, %6 : vector<256x128xf32>
    %8 = arith.truncf %7 : vector<256x128xf32> to vector<256x128xbf16>
    %c0_6 = arith.constant 0 : index
    %c0_7 = arith.constant 0 : index
    %9 = vector.load %arg4[%c0_6, %c0_7] : memref<128x128xbf16, #tpu.memory_space<vmem>>, vector<128x128xbf16>
    %cst_8 = arith.constant dense<0.000000e+00> : vector<256x128xf32>
    %10 = tpu.matmul %8, %9, %cst_8 {dimension_numbers = #tpu.dot_dimension_numbers<[1], [0], [0], [1], [0, 0, 1, 1], [], []>} : vector<256x128xbf16>, vector<128x128xbf16>, vector<256x128xf32> -> vector<256x128xf32>
    %c0_9 = arith.constant 0 : index
    %c0_10 = arith.constant 0 : index
    %11 = vector.load %arg5[%c0_9, %c0_10] : memref<1x128xf32, #tpu.memory_space<vmem>>, vector<1x128xf32>
    %12 = vector.broadcast %11 : vector<1x128xf32> to vector<256x128xf32>
    %13 = arith.addf %10, %12 : vector<256x128xf32>
    %cst_11 = arith.constant 0.000000e+00 : f32
    %14 = vector.broadcast %cst_11 : f32 to vector<256x128xf32>
    %15 = arith.maximumf %13, %14 : vector<256x128xf32>
    %16 = arith.truncf %15 : vector<256x128xf32> to vector<256x128xbf16>
    %c0_12 = arith.constant 0 : index
    %c0_13 = arith.constant 0 : index
    %17 = vector.load %arg6[%c0_12, %c0_13] : memref<128x128xbf16, #tpu.memory_space<vmem>>, vector<128x128xbf16>
    %cst_14 = arith.constant dense<0.000000e+00> : vector<256x128xf32>
    %18 = tpu.matmul %16, %17, %cst_14 {dimension_numbers = #tpu.dot_dimension_numbers<[1], [0], [0], [1], [0, 0, 1, 1], [], []>} : vector<256x128xbf16>, vector<128x128xbf16>, vector<256x128xf32> -> vector<256x128xf32>
    %c0_15 = arith.constant 0 : index
    %c0_16 = arith.constant 0 : index
    %19 = vector.load %arg7[%c0_15, %c0_16] : memref<1x128xf32, #tpu.memory_space<vmem>>, vector<1x128xf32>
    %20 = vector.broadcast %19 : vector<1x128xf32> to vector<256x128xf32>
    %21 = arith.addf %18, %20 : vector<256x128xf32>
    %22 = tpu.iota {dimensions = array<i32: 1>} : vector<256x128xi32>
    %c4_i32 = arith.constant 4 : i32
    %23 = vector.broadcast %c4_i32 : i32 to vector<256x128xi32>
    %24 = arith.cmpi slt, %22, %23 : vector<256x128xi32>
    %cst_17 = arith.constant -1.000000e+30 : f32
    %25 = vector.broadcast %cst_17 : f32 to vector<256x128xf32>
    %26 = arith.select %24, %21, %25 : vector<256x128xi1>, vector<256x128xf32>
    %cst_18 = arith.constant dense<0xFF800000> : vector<256xf32>
    %27 = vector.multi_reduction <maximumf>, %26, %cst_18 [1] : vector<256x128xf32> to vector<256xf32>
    %28 = vector.shape_cast %27 : vector<256xf32> to vector<256x1xf32>
    %29 = vector.broadcast %28 : vector<256x1xf32> to vector<256x128xf32>
    %30 = arith.subf %26, %29 : vector<256x128xf32>
    %31 = math.exp %30 : vector<256x128xf32>
    %cst_19 = arith.constant dense<0.000000e+00> : vector<256xf32>
    %32 = vector.multi_reduction <add>, %31, %cst_19 [1] : vector<256x128xf32> to vector<256xf32>
    %33 = vector.shape_cast %32 : vector<256xf32> to vector<256x1xf32>
    %34 = tpu.reciprocal %33 : vector<256x1xf32> -> vector<256x1xf32>
    %35 = vector.broadcast %34 : vector<256x1xf32> to vector<256x128xf32>
    %36 = arith.mulf %31, %35 : vector<256x128xf32>
    %c0_20 = arith.constant 0 : index
    %c0_21 = arith.constant 0 : index
    %37 = vector.load %arg8[%c0_20, %c0_21] : memref<256x128xf32, #tpu.memory_space<vmem>>, vector<256x128xf32>
    tpu.vector_store %arg8[%c0_20, %c0_21], %36 {strides = array<i32>} : memref<256x128xf32, #tpu.memory_space<vmem>>, vector<256x128xf32>,
    return
  }
  func.func @transform_0(%arg0: i32) -> (i32, i32) {
    %c0_i32 = arith.constant 0 : i32
    %c0_i32_0 = arith.constant 0 : i32
    return %arg0, %c0_i32 : i32, i32
  }
  func.func @transform_1(%arg0: i32) -> (i32, i32) {
    %c0_i32 = arith.constant 0 : i32
    %c0_i32_0 = arith.constant 0 : i32
    %c0_i32_1 = arith.constant 0 : i32
    return %c0_i32, %c0_i32_0 : i32, i32
  }
  func.func @transform_2(%arg0: i32) -> (i32, i32) {
    %c0_i32 = arith.constant 0 : i32
    %c0_i32_0 = arith.constant 0 : i32
    %c0_i32_1 = arith.constant 0 : i32
    return %c0_i32, %c0_i32_0 : i32, i32
  }
  func.func @transform_3(%arg0: i32) -> (i32, i32) {
    %c0_i32 = arith.constant 0 : i32
    %c0_i32_0 = arith.constant 0 : i32
    %c0_i32_1 = arith.constant 0 : i32
    return %c0_i32, %c0_i32_0 : i32, i32
  }
  func.func @transform_4(%arg0: i32) -> (i32, i32) {
    %c0_i32 = arith.constant 0 : i32
    %c0_i32_0 = arith.constant 0 : i32
    %c0_i32_1 = arith.constant 0 : i32
    return %c0_i32, %c0_i32_0 : i32, i32
  }
  func.func @transform_5(%arg0: i32) -> (i32, i32) {
    %c0_i32 = arith.constant 0 : i32
    %c0_i32_0 = arith.constant 0 : i32
    %c0_i32_1 = arith.constant 0 : i32
    return %c0_i32, %c0_i32_0 : i32, i32
  }
  func.func @transform_6(%arg0: i32) -> (i32, i32) {
    %c0_i32 = arith.constant 0 : i32
    %c0_i32_0 = arith.constant 0 : i32
    %c0_i32_1 = arith.constant 0 : i32
    return %c0_i32, %c0_i32_0 : i32, i32
  }
  func.func @transform_7(%arg0: i32) -> (i32, i32) {
    %c0_i32 = arith.constant 0 : i32
    %c0_i32_0 = arith.constant 0 : i32
    return %arg0, %c0_i32 : i32, i32
  }
}

module attributes {stable_mosaic.version = 11 : i64} {
  func.func @_policy_kernel(%arg0: i32, %arg1: memref<256x8xbf16, #tpu.memory_space<vmem>>, %arg2: memref<8x128xbf16, #tpu.memory_space<vmem>>, %arg3: memref<1x128xf32, #tpu.memory_space<vmem>>, %arg4: memref<128x128xbf16, #tpu.memory_space<vmem>>, %arg5: memref<1x128xf32, #tpu.memory_space<vmem>>, %arg6: memref<128x128xbf16, #tpu.memory_space<vmem>>, %arg7: memref<1x128xf32, #tpu.memory_space<vmem>>, %arg8: memref<256x128xf32, #tpu.memory_space<vmem>>) attributes {dimension_semantics = [#tpu.dimension_semantics<parallel>], iteration_bounds = array<i64: 1>, scalar_prefetch = 0 : i64, scratch_operands = 0 : i64, tpu.core_type = #tpu.core_type<tc>, window_params = [{transform_indices = @transform_0, window_bounds = array<i64: 256, 8>}, {pipeline_mode = #tpu.pipeline_mode<synchronous>, transform_indices = @transform_1, window_bounds = array<i64: 8, 128>}, {pipeline_mode = #tpu.pipeline_mode<synchronous>, transform_indices = @transform_2, window_bounds = array<i64: 1, 128>}, {pipeline_mode = #tpu.pipeline_mode<synchronous>, transform_indices = @transform_3, window_bounds = array<i64: 128, 128>}, {pipeline_mode = #tpu.pipeline_mode<synchronous>, transform_indices = @transform_4, window_bounds = array<i64: 1, 128>}, {pipeline_mode = #tpu.pipeline_mode<synchronous>, transform_indices = @transform_5, window_bounds = array<i64: 128, 128>}, {pipeline_mode = #tpu.pipeline_mode<synchronous>, transform_indices = @transform_6, window_bounds = array<i64: 1, 128>}, {transform_indices = @transform_7, window_bounds = array<i64: 256, 128>}]} {
    %c0 = arith.constant 0 : index
    %c0_0 = arith.constant 0 : index
    %0 = vector.load %arg1[%c0, %c0_0] : memref<256x8xbf16, #tpu.memory_space<vmem>>, vector<256x8xbf16>
    %c0_1 = arith.constant 0 : index
    %c0_2 = arith.constant 0 : index
    %1 = vector.load %arg2[%c0_1, %c0_2] : memref<8x128xbf16, #tpu.memory_space<vmem>>, vector<8x128xbf16>
    %cst = arith.constant dense<0.000000e+00> : vector<256x128xf32>
    %2 = tpu.matmul %0, %1, %cst {dimension_numbers = #tpu.dot_dimension_numbers<[1], [0], [0], [1], [0, 0, 1, 1], [], []>} : vector<256x8xbf16>, vector<8x128xbf16>, vector<256x128xf32> -> vector<256x128xf32>
    %c0_3 = arith.constant 0 : index
    %c0_4 = arith.constant 0 : index
    %3 = vector.load %arg3[%c0_3, %c0_4] : memref<1x128xf32, #tpu.memory_space<vmem>>, vector<1x128xf32>
    %4 = vector.broadcast %3 : vector<1x128xf32> to vector<256x128xf32>
    %5 = arith.addf %2, %4 : vector<256x128xf32>
    %cst_5 = arith.constant 0.000000e+00 : f32
    %6 = vector.broadcast %cst_5 : f32 to vector<256x128xf32>
    %7 = arith.maximumf %5, %6 : vector<256x128xf32>
    %8 = arith.truncf %7 : vector<256x128xf32> to vector<256x128xbf16>
    %c0_6 = arith.constant 0 : index
    %c0_7 = arith.constant 0 : index
    %9 = vector.load %arg4[%c0_6, %c0_7] : memref<128x128xbf16, #tpu.memory_space<vmem>>, vector<128x128xbf16>
    %cst_8 = arith.constant dense<0.000000e+00> : vector<256x128xf32>
    %10 = tpu.matmul %8, %9, %cst_8 {dimension_numbers = #tpu.dot_dimension_numbers<[1], [0], [0], [1], [0, 0, 1, 1], [], []>} : vector<256x128xbf16>, vector<128x128xbf16>, vector<256x128xf32> -> vector<256x128xf32>
    %c0_9 = arith.constant 0 : index
    %c0_10 = arith.constant 0 : index
    %11 = vector.load %arg5[%c0_9, %c0_10] : memref<1x128xf32, #tpu.memory_space<vmem>>, vector<1x128xf32>
    %12 = vector.broadcast %11 : vector<1x128xf32> to vector<256x128xf32>
    %13 = arith.addf %10, %12 : vector<256x128xf32>
    %cst_11 = arith.constant 0.000000e+00 : f32
    %14 = vector.broadcast %cst_11 : f32 to vector<256x128xf32>
    %15 = arith.maximumf %13, %14 : vector<256x128xf32>
    %16 = arith.truncf %15 : vector<256x128xf32> to vector<256x128xbf16>
    %c0_12 = arith.constant 0 : index
    %c0_13 = arith.constant 0 : index
    %17 = vector.load %arg6[%c0_12, %c0_13] : memref<128x128xbf16, #tpu.memory_space<vmem>>, vector<128x128xbf16>
    %cst_14 = arith.constant dense<0.000000e+00> : vector<256x128xf32>
    %18 = tpu.matmul %16, %17, %cst_14 {dimension_numbers = #tpu.dot_dimension_numbers<[1], [0], [0], [1], [0, 0, 1, 1], [], []>} : vector<256x128xbf16>, vector<128x128xbf16>, vector<256x128xf32> -> vector<256x128xf32>
    %c0_15 = arith.constant 0 : index
    %c0_16 = arith.constant 0 : index
    %19 = vector.load %arg7[%c0_15, %c0_16] : memref<1x128xf32, #tpu.memory_space<vmem>>, vector<1x128xf32>
    %20 = vector.broadcast %19 : vector<1x128xf32> to vector<256x128xf32>
    %21 = arith.addf %18, %20 : vector<256x128xf32>
    %22 = tpu.iota {dimensions = array<i32: 1>} : vector<256x128xi32>
    %c4_i32 = arith.constant 4 : i32
    %23 = vector.broadcast %c4_i32 : i32 to vector<256x128xi32>
    %24 = arith.cmpi slt, %22, %23 : vector<256x128xi32>
    %cst_17 = arith.constant -1.000000e+30 : f32
    %25 = vector.broadcast %cst_17 : f32 to vector<256x128xf32>
    %26 = arith.select %24, %21, %25 : vector<256x128xi1>, vector<256x128xf32>
    %cst_18 = arith.constant dense<0xFF800000> : vector<256xf32>
    %27 = vector.multi_reduction <maximumf>, %26, %cst_18 [1] : vector<256x128xf32> to vector<256xf32>
    %28 = vector.shape_cast %27 : vector<256xf32> to vector<256x1xf32>
    %29 = vector.broadcast %28 : vector<256x1xf32> to vector<256x128xf32>
    %30 = arith.subf %26, %29 : vector<256x128xf32>
    %31 = math.exp %30 : vector<256x128xf32>
    %cst_19 = arith.constant dense<0.000000e+00> : vector<256xf32>
    %32 = vector.multi_reduction <add>, %31, %cst_19 [1] : vector<256x128xf32> to vector<256xf32>
    %33 = vector.shape_cast %32 : vector<256xf32> to vector<256x1xf32>
    %34 = tpu.reciprocal %33 : vector<256x1xf32> -> vector<256x1xf32>
    %35 = vector.broadcast %34 : vector<256x1xf32> to vector<256x128xf32>
    %36 = arith.mulf %31, %35 : vector<256x128xf32>
    %c0_20 = arith.constant 0 : index
    %c0_21 = arith.constant 0 : index
    %37 = vector.load %arg8[%c0_20, %c0_21] : memref<256x128xf32, #tpu.memory_space<vmem>>, vector<256x128xf32>
    tpu.vector_store %arg8[%c0_20, %c0_21], %36 {strides = array<i32>} : memref<256x128xf32, #tpu.memory_space<vmem>>, vector<256x128xf32>,
    return
  }
  func.func @transform_0(%arg0: i32) -> (i32, i32) {
    %c0_i32 = arith.constant 0 : i32
    %c0_i32_0 = arith.constant 0 : i32
    return %arg0, %c0_i32 : i32, i32
  }
  func.func @transform_1(%arg0: i32) -> (i32, i32) {
    %c0_i32 = arith.constant 0 : i32
    %c0_i32_0 = arith.constant 0 : i32
    %c0_i32_1 = arith.constant 0 : i32
    return %c0_i32, %c0_i32_0 : i32, i32
  }
  func.func @transform_2(%arg0: i32) -> (i32, i32) {
    %c0_i32 = arith.constant 0 : i32
    %c0_i32_0 = arith.constant 0 : i32
    %c0_i32_1 = arith.constant 0 : i32
    return %c0_i32, %c0_i32_0 : i32, i32
  }
  func.func @transform_3(%arg0: i32) -> (i32, i32) {
    %c0_i32 = arith.constant 0 : i32
    %c0_i32_0 = arith.constant 0 : i32
    %c0_i32_1 = arith.constant 0 : i32
    return %c0_i32, %c0_i32_0 : i32, i32
  }
  func.func @transform_4(%arg0: i32) -> (i32, i32) {
    %c0_i32 = arith.constant 0 : i32
    %c0_i32_0 = arith.constant 0 : i32
    %c0_i32_1 = arith.constant 0 : i32
    return %c0_i32, %c0_i32_0 : i32, i32
  }
  func.func @transform_5(%arg0: i32) -> (i32, i32) {
    %c0_i32 = arith.constant 0 : i32
    %c0_i32_0 = arith.constant 0 : i32
    %c0_i32_1 = arith.constant 0 : i32
    return %c0_i32, %c0_i32_0 : i32, i32
  }
  func.func @transform_6(%arg0: i32) -> (i32, i32) {
    %c0_i32 = arith.constant 0 : i32
    %c0_i32_0 = arith.constant 0 : i32
    %c0_i32_1 = arith.constant 0 : i32
    return %c0_i32, %c0_i32_0 : i32, i32
  }
  func.func @transform_7(%arg0: i32) -> (i32, i32) {
    %c0_i32 = arith.constant 0 : i32
    %c0_i32_0 = arith.constant 0 : i32
    return %arg0, %c0_i32 : i32, i32
  }
}

</mosaic_0001>

<llo_original>
// kernel: tpu_custom_call.1
$region0: #{tpu_custom_call.1}
  #allocation0 [shape = 'u32[]', space=smem, size = 0x4, offset = 0x4, fixed_abs, tag = 'smem constant byte address 0x4 - core index']
  #allocation1 [shape = 'u32[144,128]{1,0:T(1,128)}', space=vmem, size = 0x12000, scoped, tag = 'internal scratch']
  %s0 = inlined_call_operand.vmem [shape: bf16[256,8], index: 0, kind: input, shape index: {}]
  %s1 = inlined_call_operand.vmem [shape: bf16[8,128], index: 1, kind: input, shape index: {}]
  %s2 = inlined_call_operand.vmem [shape: f32[1,128], index: 2, kind: input, shape index: {}]
  %s3 = inlined_call_operand.vmem [shape: bf16[128,128], index: 3, kind: input, shape index: {}]
  %s4 = inlined_call_operand.vmem [shape: f32[1,128], index: 4, kind: input, shape index: {}]
  %s5 = inlined_call_operand.vmem [shape: bf16[128,128], index: 5, kind: input, shape index: {}]
  %s6 = inlined_call_operand.vmem [shape: f32[1,128], index: 6, kind: input, shape index: {}]
  %s7 = inlined_call_operand.hbm [shape: f32[256,128], index: 7, kind: output, shape index: {}]
  %s8 = sld [smem:[#allocation0]]
  $region38: #{tpu_custom_call.1} parent=0
    _
  %s10 = ssub.s32 1, %s8
  %s11 = scalar_select 0, %s10, %s8
  $region1: #{tpu_custom_call.1} parent=0
    #allocation2 [shape = 'u8[131072]{0}', space=vmem, size = 0x20000, scoped, tag = 'output window, operand 0, single buffered']
    #allocation3 [shape = 's32[1]{0}', space=sflag, size = 0x4, scoped, tag = 'scoped memory for tpu_custom_call.1']
    %12 = vsyncpa [#allocation3], 0
    // Predicated region
    $region2: #{tpu_custom_call.1} parent=1 // pred_check
      _
    $region3: #{tpu_custom_call.1} parent=1 // pred_check_branch
      %14 = sbr.rel (0) target = $region5
    $region4: #{tpu_custom_call.1} parent=1 // pred_region
      _
    $region5: #{tpu_custom_call.1} parent=1 // pred_fallthru
      _
    // Predicated region
    $region6: #{tpu_custom_call.1} parent=1 // pred_check
      _
    $region7: #{tpu_custom_call.1} parent=1 // pred_check_branch
      %16 = sbr.rel (0) target = $region9
    $region8: #{tpu_custom_call.1} parent=1 // pred_region
      _
    $region9: #{tpu_custom_call.1} parent=1 // pred_fallthru
      _
    // Predicated region
    $region10: #{tpu_custom_call.1} parent=1 // pred_check
      _
    $region11: #{tpu_custom_call.1} parent=1 // pred_check_branch
      %18 = sbr.rel (0) target = $region13
    $region12: #{tpu_custom_call.1} parent=1 // pred_region
      _
    $region13: #{tpu_custom_call.1} parent=1 // pred_fallthru
      _
    // Predicated region
    $region14: #{tpu_custom_call.1} parent=1 // pred_check
      _
    $region15: #{tpu_custom_call.1} parent=1 // pred_check_branch
      %20 = sbr.rel (0) target = $region17
    $region16: #{tpu_custom_call.1} parent=1 // pred_region
      _
    $region17: #{tpu_custom_call.1} parent=1 // pred_fallthru
      _
    // Predicated region
    $region18: #{tpu_custom_call.1} parent=1 // pred_check
      _
    $region19: #{tpu_custom_call.1} parent=1 // pred_check_branch
      %22 = sbr.rel (0) target = $region21
    $region20: #{tpu_custom_call.1} parent=1 // pred_region
      _
    $region21: #{tpu_custom_call.1} parent=1 // pred_fallthru
      _
    // Predicated region
    $region22: #{tpu_custom_call.1} parent=1 // pred_check
      _
    $region23: #{tpu_custom_call.1} parent=1 // pred_check_branch
      %24 = sbr.rel (0) target = $region25
    $region24: #{tpu_custom_call.1} parent=1 // pred_region
      _
    $region25: #{tpu_custom_call.1} parent=1 // pred_fallthru
      _
    // Predicated region
    $region26: #{tpu_custom_call.1} parent=1 // pred_check
      _
    $region27: #{tpu_custom_call.1} parent=1 // pred_check_branch
      %26 = sbr.rel (0) target = $region29
    $region28: #{tpu_custom_call.1} parent=1 // pred_region
      _
    $region29: #{tpu_custom_call.1} parent=1 // pred_fallthru
      _
    %v28 = vld [vmem:[%s0] sm:$0xf]
    %v29 = vld [vmem:[%s0 + $0x4] sm:$0xf]
    %v30 = vld [vmem:[%s0 + $0x8] sm:$0xf]
    %v31 = vld [vmem:[%s0 + $0xc] sm:$0xf]
    %v32 = vld [vmem:[%s0 + $0x10] sm:$0xf]
    %v33 = vld [vmem:[%s0 + $0x14] sm:$0xf]
    %v34 = vld [vmem:[%s0 + $0x18] sm:$0xf]
    %v35 = vld [vmem:[%s0 + $0x1c] sm:$0xf]
    %v36 = vld [vmem:[%s0 + $0x20] sm:$0xf]
    %v37 = vld [vmem:[%s0 + $0x24] sm:$0xf]
    %v38 = vld [vmem:[%s0 + $0x28] sm:$0xf]
    %v39 = vld [vmem:[%s0 + $0x2c] sm:$0xf]
    %v40 = vld [vmem:[%s0 + $0x30] sm:$0xf]
    %v41 = vld [vmem:[%s0 + $0x34] sm:$0xf]
    %v42 = vld [vmem:[%s0 + $0x38] sm:$0xf]
    %v43 = vld [vmem:[%s0 + $0x3c] sm:$0xf]
    %v44 = vld [vmem:[%s0 + $0x40] sm:$0xf]
    %v45 = vld [vmem:[%s0 + $0x44] sm:$0xf]
    %v46 = vld [vmem:[%s0 + $0x48] sm:$0xf]
    %v47 = vld [vmem:[%s0 + $0x4c] sm:$0xf]
    %v48 = vld [vmem:[%s0 + $0x50] sm:$0xf]
    %v49 = vld [vmem:[%s0 + $0x54] sm:$0xf]
    %v50 = vld [vmem:[%s0 + $0x58] sm:$0xf]
    %v51 = vld [vmem:[%s0 + $0x5c] sm:$0xf]
    %v52 = vld [vmem:[%s0 + $0x60] sm:$0xf]
    %v53 = vld [vmem:[%s0 + $0x64] sm:$0xf]
    %v54 = vld [vmem:[%s0 + $0x68] sm:$0xf]
    %v55 = vld [vmem:[%s0 + $0x6c] sm:$0xf]
    %v56 = vld [vmem:[%s0 + $0x70] sm:$0xf]
    %v57 = vld [vmem:[%s0 + $0x74] sm:$0xf]
    %v58 = vld [vmem:[%s0 + $0x78] sm:$0xf]
    %v59 = vld [vmem:[%s0 + $0x7c] sm:$0xf]
    %v60 = vld [vmem:[%s1] sm:$0xf]
    %v61 = vld [vmem:[%s2] sm:$0x1]
    %v63 = vlaneseq
    %v64 = vshrl.u32 %v63, 7
    %v65 = vsub.s32 0, %v64
    %v66 = vrot.slane %v61, %v65
    %v100 = vunpack.c.l.b16 %v28
    %v101 = vunpack.c.l.b16 %v29
    %v102 = vunpack.c.l.b16 %v30
    %v103 = vunpack.c.l.b16 %v31
    %v104 = vunpack.c.l.b16 %v32
    %v105 = vunpack.c.l.b16 %v33
    %v106 = vunpack.c.l.b16 %v34
    %v107 = vunpack.c.l.b16 %v35
    %v108 = vunpack.c.l.b16 %v36
    %v109 = vunpack.c.l.b16 %v37
    %v110 = vunpack.c.l.b16 %v38
    %v111 = vunpack.c.l.b16 %v39
    %v112 = vunpack.c.l.b16 %v40
    %v113 = vunpack.c.l.b16 %v41
    %v114 = vunpack.c.l.b16 %v42
    %v115 = vunpack.c.l.b16 %v43
    %v116 = vunpack.c.l.b16 %v44
    %v117 = vunpack.c.l.b16 %v45
    %v118 = vunpack.c.l.b16 %v46
    %v119 = vunpack.c.l.b16 %v47
    %v120 = vunpack.c.l.b16 %v48
    %v121 = vunpack.c.l.b16 %v49
    %v122 = vunpack.c.l.b16 %v50
    %v123 = vunpack.c.l.b16 %v51
    %v124 = vunpack.c.l.b16 %v52
    %v125 = vunpack.c.l.b16 %v53
    %v126 = vunpack.c.l.b16 %v54
    %v127 = vunpack.c.l.b16 %v55
    %v128 = vunpack.c.l.b16 %v56
    %v129 = vunpack.c.l.b16 %v57
    %v130 = vunpack.c.l.b16 %v58
    %v131 = vunpack.c.l.b16 %v59
    %v132 = vpack.c.b16 %v101, %v100
    %v133 = vpack.c.b16 %v103, %v102
    %v134 = vpack.c.b16 %v105, %v104
    %v135 = vpack.c.b16 %v107, %v106
    %v136 = vpack.c.b16 %v109, %v108
    %v137 = vpack.c.b16 %v111, %v110
    %v138 = vpack.c.b16 %v113, %v112
    %v139 = vpack.c.b16 %v115, %v114
    %v140 = vpack.c.b16 %v117, %v116
    %v141 = vpack.c.b16 %v119, %v118
    %v142 = vpack.c.b16 %v121, %v120
    %v143 = vpack.c.b16 %v123, %v122
    %v144 = vpack.c.b16 %v125, %v124
    %v145 = vpack.c.b16 %v127, %v126
    %v146 = vpack.c.b16 %v129, %v128
    %v147 = vpack.c.b16 %v131, %v130
    %vm148 = vcmask 64512
    %v150 = vsel %vm148, %v132, 0
    %v153 = vsel %vm148, %v133, 0
    %v156 = vsel %vm148, %v134, 0
    %v159 = vsel %vm148, %v135, 0
    %v162 = vsel %vm148, %v136, 0
    %v165 = vsel %vm148, %v137, 0
    %v168 = vsel %vm148, %v138, 0
    %v171 = vsel %vm148, %v139, 0
    %v174 = vsel %vm148, %v140, 0
    %v177 = vsel %vm148, %v141, 0
    %v180 = vsel %vm148, %v142, 0
    %v183 = vsel %vm148, %v143, 0
    %v186 = vsel %vm148, %v144, 0
    %v189 = vsel %vm148, %v145, 0
    %v192 = vsel %vm148, %v146, 0
    %v195 = vsel %vm148, %v147, 0
    %vm197 = vcmask 1043456
    %v199 = vsel %vm197, %v60, 0
    %201 = vmatprep.subr.bf16.mxu0 0
    %202 = vmatpush1.bf16.msra.mxu0 %v199
    %203 = vmatprep.subr.bf16.mxu0 0
    %204 = vmatpush1.bf16.msra.mxu0 0
    %205 = vmatprep.subr.bf16.mxu0 0
    %206 = vmatpush1.bf16.msra.mxu0 0
    %207 = vmatprep.subr.bf16.mxu0 0
    %208 = vmatpush1.bf16.msra.mxu0 0
    %209 = vmatprep.subr.bf16.mxu0 0
    %210 = vmatpush1.bf16.msra.mxu0 0
    %211 = vmatprep.subr.bf16.mxu0 0
    %212 = vmatpush1.bf16.msra.mxu0 0
    %213 = vmatprep.subr.bf16.mxu0 0
    %214 = vmatpush1.bf16.msra.mxu0 0
    %215 = vmatprep.subr.bf16.mxu0 0
    %216 = vmatpush1.bf16.msra.mxu0 0
    %217 = vmatprep.subr.bf16.mxu0 0
    %218 = vmatpush1.bf16.msra.mxu0 0
    %219 = vmatprep.subr.bf16.mxu0 0
    %220 = vmatpush1.bf16.msra.mxu0 0
    %221 = vmatprep.subr.bf16.mxu0 0
    %222 = vmatpush1.bf16.msra.mxu0 0
    %223 = vmatprep.subr.bf16.mxu0 0
    %224 = vmatpush1.bf16.msra.mxu0 0
    %225 = vmatprep.subr.bf16.mxu0 0
    %226 = vmatpush1.bf16.msra.mxu0 0
    %227 = vmatprep.subr.bf16.mxu0 0
    %228 = vmatpush1.bf16.msra.mxu0 0
    %229 = vmatprep.subr.bf16.mxu0 0
    %230 = vmatpush1.bf16.msra.mxu0 0
    %231 = vmatprep.subr.bf16.mxu0 0
    %232 = vmatpush1.bf16.msra.mxu0 0
    %233 = vmatprep.mubr.bf16.mxu0 0
    %234 = vmatmul.mubr.bf16.gmra.mrb[0].mxu0 %v150
    %v235 = vpop.f32.mrb[0].mxu0
    %v236 = vadd.f32 %v66, %v235
    %v237 = vpop.f32.mrb[0].mxu0
    %v238 = vpop.f32.mrb[0].mxu0
    %v239 = vadd.f32 %v66, %v238
    %v240 = vpop.f32.mrb[0].mxu0
    %241 = vmatprep.mubr.bf16.mxu0 0
    %242 = vmatmul.mubr.bf16.gmra.mrb[0].mxu0 %v153
    %v243 = vpop.f32.mrb[0].mxu0
    %v244 = vadd.f32 %v66, %v243
    %v245 = vpop.f32.mrb[0].mxu0
    %v246 = vpop.f32.mrb[0].mxu0
    %v247 = vadd.f32 %v66, %v246
    %v248 = vpop.f32.mrb[0].mxu0
    %249 = vmatprep.mubr.bf16.mxu0 0
    %250 = vmatmul.mubr.bf16.gmra.mrb[0].mxu0 %v156
    %v251 = vpop.f32.mrb[0].mxu0
    %v252 = vadd.f32 %v66, %v251
    %v253 = vpop.f32.mrb[0].mxu0
    %v254 = vpop.f32.mrb[0].mxu0
    %v255 = vadd.f32 %v66, %v254
    %v256 = vpop.f32.mrb[0].mxu0
    %257 = vmatprep.mubr.bf16.mxu0 0
    %258 = vmatmul.mubr.bf16.gmra.mrb[0].mxu0 %v159
    %v259 = vpop.f32.mrb[0].mxu0
    %v260 = vadd.f32 %v66, %v259
    %v261 = vpop.f32.mrb[0].mxu0
    %v262 = vpop.f32.mrb[0].mxu0
    %v263 = vadd.f32 %v66, %v262
    %v264 = vpop.f32.mrb[0].mxu0
    %265 = vmatprep.mubr.bf16.mxu0 0
    %266 = vmatmul.mubr.bf16.gmra.mrb[0].mxu0 %v162
    %v267 = vpop.f32.mrb[0].mxu0
    %v268 = vadd.f32 %v66, %v267
    %v269 = vpop.f32.mrb[0].mxu0
    %v270 = vpop.f32.mrb[0].mxu0
    %v271 = vadd.f32 %v66, %v270
    %v272 = vpop.f32.mrb[0].mxu0
    %273 = vmatprep.mubr.bf16.mxu0 0
    %274 = vmatmul.mubr.bf16.gmra.mrb[0].mxu0 %v165
    %v275 = vpop.f32.mrb[0].mxu0
    %v276 = vadd.f32 %v66, %v275
    %v277 = vpop.f32.mrb[0].mxu0
    %v278 = vpop.f32.mrb[0].mxu0
    %v279 = vadd.f32 %v66, %v278
    %v280 = vpop.f32.mrb[0].mxu0
    %281 = vmatprep.mubr.bf16.mxu0 0
    %282 = vmatmul.mubr.bf16.gmra.mrb[0].mxu0 %v168
    %v283 = vpop.f32.mrb[0].mxu0
    %v284 = vadd.f32 %v66, %v283
    %v285 = vpop.f32.mrb[0].mxu0
    %v286 = vpop.f32.mrb[0].mxu0
    %v287 = vadd.f32 %v66, %v286
    %v288 = vpop.f32.mrb[0].mxu0
    %289 = vmatprep.mubr.bf16.mxu0 0
    %290 = vmatmul.mubr.bf16.gmra.mrb[0].mxu0 %v171
    %v291 = vpop.f32.mrb[0].mxu0
    %v292 = vadd.f32 %v66, %v291
    %v293 = vpop.f32.mrb[0].mxu0
    %v294 = vpop.f32.mrb[0].mxu0
    %v295 = vadd.f32 %v66, %v294
    %v296 = vpop.f32.mrb[0].mxu0
    %297 = vmatprep.mubr.bf16.mxu0 0
    %298 = vmatmul.mubr.bf16.gmra.mrb[0].mxu0 %v174
    %v299 = vpop.f32.mrb[0].mxu0
    %v300 = vadd.f32 %v66, %v299
    %v301 = vpop.f32.mrb[0].mxu0
    %v302 = vpop.f32.mrb[0].mxu0
    %v303 = vadd.f32 %v66, %v302
    %v304 = vpop.f32.mrb[0].mxu0
    %305 = vmatprep.mubr.bf16.mxu0 0
    %306 = vmatmul.mubr.bf16.gmra.mrb[0].mxu0 %v177
    %v307 = vpop.f32.mrb[0].mxu0
    %v308 = vadd.f32 %v66, %v307
    %v309 = vpop.f32.mrb[0].mxu0
    %v310 = vpop.f32.mrb[0].mxu0
    %v311 = vadd.f32 %v66, %v310
    %v312 = vpop.f32.mrb[0].mxu0
    %313 = vmatprep.mubr.bf16.mxu0 0
    %314 = vmatmul.mubr.bf16.gmra.mrb[0].mxu0 %v180
    %v315 = vpop.f32.mrb[0].mxu0
    %v316 = vadd.f32 %v66, %v315
    %v317 = vpop.f32.mrb[0].mxu0
    %v318 = vpop.f32.mrb[0].mxu0
    %v319 = vadd.f32 %v66, %v318
    %v320 = vpop.f32.mrb[0].mxu0
    %321 = vmatprep.mubr.bf16.mxu0 0
    %322 = vmatmul.mubr.bf16.gmra.mrb[0].mxu0 %v183
    %v323 = vpop.f32.mrb[0].mxu0
    %v324 = vadd.f32 %v66, %v323
    %v325 = vpop.f32.mrb[0].mxu0
    %v326 = vpop.f32.mrb[0].mxu0
    %v327 = vadd.f32 %v66, %v326
    %v328 = vpop.f32.mrb[0].mxu0
    %329 = vmatprep.mubr.bf16.mxu0 0
    %330 = vmatmul.mubr.bf16.gmra.mrb[0].mxu0 %v186
    %v331 = vpop.f32.mrb[0].mxu0
    %v332 = vadd.f32 %v66, %v331
    %v333 = vpop.f32.mrb[0].mxu0
    %v334 = vpop.f32.mrb[0].mxu0
    %v335 = vadd.f32 %v66, %v334
    %v336 = vpop.f32.mrb[0].mxu0
    %337 = vmatprep.mubr.bf16.mxu0 0
    %338 = vmatmul.mubr.bf16.gmra.mrb[0].mxu0 %v189
    %v339 = vpop.f32.mrb[0].mxu0
    %v340 = vadd.f32 %v66, %v339
    %v341 = vpop.f32.mrb[0].mxu0
    %v342 = vpop.f32.mrb[0].mxu0
    %v343 = vadd.f32 %v66, %v342
    %v344 = vpop.f32.mrb[0].mxu0
    %345 = vmatprep.mubr.bf16.mxu0 0
    %346 = vmatmul.mubr.bf16.gmra.mrb[0].mxu0 %v192
    %v347 = vpop.f32.mrb[0].mxu0
    %v348 = vadd.f32 %v66, %v347
    %v349 = vpop.f32.mrb[0].mxu0
    %v350 = vpop.f32.mrb[0].mxu0
    %v351 = vadd.f32 %v66, %v350
    %v352 = vpop.f32.mrb[0].mxu0
    %353 = vmatprep.mubr.bf16.mxu0 0
    %354 = vmatmul.mubr.bf16.gmra.mrb[0].mxu0 %v195
    %v355 = vpop.f32.mrb[0].mxu0
    %v356 = vadd.f32 %v66, %v355
    %v357 = vpop.f32.mrb[0].mxu0
    %v358 = vpop.f32.mrb[0].mxu0
    %v359 = vadd.f32 %v66, %v358
    %v360 = vpop.f32.mrb[0].mxu0
    %361 = vdwg.mxu0
    %v362 = vmax.f32 %v236, 0.0
    %v363 = vmax.f32 %v239, 0.0
    %v364 = vmax.f32 %v244, 0.0
    %v365 = vmax.f32 %v247, 0.0
    %v366 = vmax.f32 %v252, 0.0
    %v367 = vmax.f32 %v255, 0.0
    %v368 = vmax.f32 %v260, 0.0
    %v369 = vmax.f32 %v263, 0.0
    %v370 = vmax.f32 %v268, 0.0
    %v371 = vmax.f32 %v271, 0.0
    %v372 = vmax.f32 %v276, 0.0
    %v373 = vmax.f32 %v279, 0.0
    %v374 = vmax.f32 %v284, 0.0
    %v375 = vmax.f32 %v287, 0.0
    %v376 = vmax.f32 %v292, 0.0
    %v377 = vmax.f32 %v295, 0.0
    %v378 = vmax.f32 %v300, 0.0
    %v379 = vmax.f32 %v303, 0.0
    %v380 = vmax.f32 %v308, 0.0
    %v381 = vmax.f32 %v311, 0.0
    %v382 = vmax.f32 %v316, 0.0
    %v383 = vmax.f32 %v319, 0.0
    %v384 = vmax.f32 %v324, 0.0
    %v385 = vmax.f32 %v327, 0.0
    %v386 = vmax.f32 %v332, 0.0
    %v387 = vmax.f32 %v335, 0.0
    %v388 = vmax.f32 %v340, 0.0
    %v389 = vmax.f32 %v343, 0.0
    %v390 = vmax.f32 %v348, 0.0
    %v391 = vmax.f32 %v351, 0.0
    %v392 = vmax.f32 %v356, 0.0
    %v393 = vmax.f32 %v359, 0.0
    %v394 = vpack.c.bf16 %v363, %v362
    %v395 = vpack.c.bf16 %v365, %v364
    %v396 = vpack.c.bf16 %v367, %v366
    %v397 = vpack.c.bf16 %v369, %v368
    %v398 = vpack.c.bf16 %v371, %v370
    %v399 = vpack.c.bf16 %v373, %v372
    %v400 = vpack.c.bf16 %v375, %v374
    %v401 = vpack.c.bf16 %v377, %v376
    %v402 = vpack.c.bf16 %v379, %v378
    %v403 = vpack.c.bf16 %v381, %v380
    %v404 = vpack.c.bf16 %v383, %v382
    %v405 = vpack.c.bf16 %v385, %v384
    %v406 = vpack.c.bf16 %v387, %v386
    %v407 = vpack.c.bf16 %v389, %v388
    %v408 = vpack.c.bf16 %v391, %v390
    %v409 = vpack.c.bf16 %v393, %v392
    %v410 = vld [vmem:[%s3] sm:$0xf]
    %v411 = vld [vmem:[%s3 + $0x4] sm:$0xf]
    %v412 = vld [vmem:[%s3 + $0x8] sm:$0xf]
    %v413 = vld [vmem:[%s3 + $0xc] sm:$0xf]
    %v414 = vld [vmem:[%s3 + $0x10] sm:$0xf]
    %v415 = vld [vmem:[%s3 + $0x14] sm:$0xf]
    %v416 = vld [vmem:[%s3 + $0x18] sm:$0xf]
    %v417 = vld [vmem:[%s3 + $0x1c] sm:$0xf]
    %v418 = vld [vmem:[%s3 + $0x20] sm:$0xf]
    %v419 = vld [vmem:[%s3 + $0x24] sm:$0xf]
    %v420 = vld [vmem:[%s3 + $0x28] sm:$0xf]
    %v421 = vld [vmem:[%s3 + $0x2c] sm:$0xf]
    %v422 = vld [vmem:[%s3 + $0x30] sm:$0xf]
    %v423 = vld [vmem:[%s3 + $0x34] sm:$0xf]
    %v424 = vld [vmem:[%s3 + $0x38] sm:$0xf]
    %v425 = vld [vmem:[%s3 + $0x3c] sm:$0xf]
    %v426 = vld [vmem:[%s4] sm:$0x1]
    %v428 = vlaneseq
    %v429 = vshrl.u32 %v428, 7
    %v430 = vsub.s32 0, %v429
    %v431 = vrot.slane %v426, %v430
    %v449 = vunpack.c.l.b16 %v410
    %v450 = vunpack.c.l.b16 %v411
    %v451 = vunpack.c.l.b16 %v412
    %v452 = vunpack.c.l.b16 %v413
    %v453 = vunpack.c.l.b16 %v414
    %v454 = vunpack.c.l.b16 %v415
    %v455 = vunpack.c.l.b16 %v416
    %v456 = vunpack.c.l.b16 %v417
    %v457 = vunpack.c.l.b16 %v418
    %v458 = vunpack.c.l.b16 %v419
    %v459 = vunpack.c.l.b16 %v420
    %v460 = vunpack.c.l.b16 %v421
    %v461 = vunpack.c.l.b16 %v422
    %v462 = vunpack.c.l.b16 %v423
    %v463 = vunpack.c.l.b16 %v424
    %v464 = vunpack.c.l.b16 %v425
    %v465 = vpack.c.b16 %v450, %v449
    %v466 = vpack.c.b16 %v452, %v451
    %v467 = vpack.c.b16 %v454, %v453
    %v468 = vpack.c.b16 %v456, %v455
    %v469 = vpack.c.b16 %v458, %v457
    %v470 = vpack.c.b16 %v460, %v459
    %v471 = vpack.c.b16 %v462, %v461
    %v472 = vpack.c.b16 %v464, %v463
    %481 = vmatprep.subr.bf16.mxu0 0
    %482 = vmatpush1.bf16.msra.mxu0 %v465
    %483 = vmatprep.subr.bf16.mxu0 0
    %484 = vmatpush1.bf16.msra.mxu0 %v466
    %485 = vmatprep.subr.bf16.mxu0 0
    %486 = vmatpush1.bf16.msra.mxu0 %v467
    %487 = vmatprep.subr.bf16.mxu0 0
    %488 = vmatpush1.bf16.msra.mxu0 %v468
    %489 = vmatprep.subr.bf16.mxu0 0
    %490 = vmatpush1.bf16.msra.mxu0 %v469
    %491 = vmatprep.subr.bf16.mxu0 0
    %492 = vmatpush1.bf16.msra.mxu0 %v470
    %493 = vmatprep.subr.bf16.mxu0 0
    %494 = vmatpush1.bf16.msra.mxu0 %v471
    %495 = vmatprep.subr.bf16.mxu0 0
    %496 = vmatpush1.bf16.msra.mxu0 %v472
    %497 = vmatprep.subr.bf16.mxu0 0
    %498 = vmatpush1.bf16.msra.mxu0 0
    %499 = vmatprep.subr.bf16.mxu0 0
    %500 = vmatpush1.bf16.msra.mxu0 0
    %501 = vmatprep.subr.bf16.mxu0 0
    %502 = vmatpush1.bf16.msra.mxu0 0
    %503 = vmatprep.subr.bf16.mxu0 0
    %504 = vmatpush1.bf16.msra.mxu0 0
    %505 = vmatprep.subr.bf16.mxu0 0
    %506 = vmatpush1.bf16.msra.mxu0 0
    %507 = vmatprep.subr.bf16.mxu0 0
    %508 = vmatpush1.bf16.msra.mxu0 0
    %509 = vmatprep.subr.bf16.mxu0 0
    %510 = vmatpush1.bf16.msra.mxu0 0
    %511 = vmatprep.subr.bf16.mxu0 0
    %512 = vmatpush1.bf16.msra.mxu0 0
    %513 = vmatprep.mubr.bf16.mxu0 0
    %514 = vmatmul.mubr.bf16.gmra.mrb[0].mxu0 %v394
    %v515 = vpop.f32.mrb[0].mxu0
    %v516 = vadd.f32 %v431, %v515
    %v517 = vpop.f32.mrb[0].mxu0
    %v518 = vpop.f32.mrb[0].mxu0
    %v519 = vadd.f32 %v431, %v518
    %v520 = vpop.f32.mrb[0].mxu0
    %521 = vmatprep.mubr.bf16.mxu0 0
    %522 = vmatmul.mubr.bf16.gmra.mrb[0].mxu0 %v395
    %v523 = vpop.f32.mrb[0].mxu0
    %v524 = vadd.f32 %v431, %v523
    %v525 = vpop.f32.mrb[0].mxu0
    %v526 = vpop.f32.mrb[0].mxu0
    %v527 = vadd.f32 %v431, %v526
    %v528 = vpop.f32.mrb[0].mxu0
    %529 = vmatprep.mubr.bf16.mxu0 0
    %530 = vmatmul.mubr.bf16.gmra.mrb[0].mxu0 %v396
    %v531 = vpop.f32.mrb[0].mxu0
    %v532 = vadd.f32 %v431, %v531
    %v533 = vpop.f32.mrb[0].mxu0
    %v534 = vpop.f32.mrb[0].mxu0
    %v535 = vadd.f32 %v431, %v534
    %v536 = vpop.f32.mrb[0].mxu0
    %537 = vmatprep.mubr.bf16.mxu0 0
    %538 = vmatmul.mubr.bf16.gmra.mrb[0].mxu0 %v397
    %v539 = vpop.f32.mrb[0].mxu0
    %v540 = vadd.f32 %v431, %v539
    %v541 = vpop.f32.mrb[0].mxu0
    %v542 = vpop.f32.mrb[0].mxu0
    %v543 = vadd.f32 %v431, %v542
    %v544 = vpop.f32.mrb[0].mxu0
    %545 = vmatprep.mubr.bf16.mxu0 0
    %546 = vmatmul.mubr.bf16.gmra.mrb[0].mxu0 %v398
    %v547 = vpop.f32.mrb[0].mxu0
    %v548 = vadd.f32 %v431, %v547
    %v549 = vpop.f32.mrb[0].mxu0
    %v550 = vpop.f32.mrb[0].mxu0
    %v551 = vadd.f32 %v431, %v550
    %v552 = vpop.f32.mrb[0].mxu0
    %553 = vmatprep.mubr.bf16.mxu0 0
    %554 = vmatmul.mubr.bf16.gmra.mrb[0].mxu0 %v399
    %v555 = vpop.f32.mrb[0].mxu0
    %v556 = vadd.f32 %v431, %v555
    %v557 = vpop.f32.mrb[0].mxu0
    %v558 = vpop.f32.mrb[0].mxu0
    %v559 = vadd.f32 %v431, %v558
    %v560 = vpop.f32.mrb[0].mxu0
    %561 = vmatprep.mubr.bf16.mxu0 0
    %562 = vmatmul.mubr.bf16.gmra.mrb[0].mxu0 %v400
    %v563 = vpop.f32.mrb[0].mxu0
    %v564 = vadd.f32 %v431, %v563
    %v565 = vpop.f32.mrb[0].mxu0
    %v566 = vpop.f32.mrb[0].mxu0
    %v567 = vadd.f32 %v431, %v566
    %v568 = vpop.f32.mrb[0].mxu0
    %569 = vmatprep.mubr.bf16.mxu0 0
    %570 = vmatmul.mubr.bf16.gmra.mrb[0].mxu0 %v401
    %v571 = vpop.f32.mrb[0].mxu0
    %v572 = vadd.f32 %v431, %v571
    %v573 = vpop.f32.mrb[0].mxu0
    %v574 = vpop.f32.mrb[0].mxu0
    %v575 = vadd.f32 %v431, %v574
    %v576 = vpop.f32.mrb[0].mxu0
    %577 = vmatprep.mubr.bf16.mxu0 0
    %578 = vmatmul.mubr.bf16.gmra.mrb[0].mxu0 %v402
    %v579 = vpop.f32.mrb[0].mxu0
    %v580 = vadd.f32 %v431, %v579
    %v581 = vpop.f32.mrb[0].mxu0
    %v582 = vpop.f32.mrb[0].mxu0
    %v583 = vadd.f32 %v431, %v582
    %v584 = vpop.f32.mrb[0].mxu0
    %585 = vmatprep.mubr.bf16.mxu0 0
    %586 = vmatmul.mubr.bf16.gmra.mrb[0].mxu0 %v403
    %v587 = vpop.f32.mrb[0].mxu0
    %v588 = vadd.f32 %v431, %v587
    %v589 = vpop.f32.mrb[0].mxu0
    %v590 = vpop.f32.mrb[0].mxu0
    %v591 = vadd.f32 %v431, %v590
    %v592 = vpop.f32.mrb[0].mxu0
    %593 = vmatprep.mubr.bf16.mxu0 0
    %594 = vmatmul.mubr.bf16.gmra.mrb[0].mxu0 %v404
    %v595 = vpop.f32.mrb[0].mxu0
    %v596 = vadd.f32 %v431, %v595
    %v597 = vpop.f32.mrb[0].mxu0
    %v598 = vpop.f32.mrb[0].mxu0
    %v599 = vadd.f32 %v431, %v598
    %v600 = vpop.f32.mrb[0].mxu0
    %601 = vmatprep.mubr.bf16.mxu0 0
    %602 = vmatmul.mubr.bf16.gmra.mrb[0].mxu0 %v405
    %v603 = vpop.f32.mrb[0].mxu0
    %v604 = vadd.f32 %v431, %v603
    %v605 = vpop.f32.mrb[0].mxu0
    %v606 = vpop.f32.mrb[0].mxu0
    %v607 = vadd.f32 %v431, %v606
    %v608 = vpop.f32.mrb[0].mxu0
    %609 = vmatprep.mubr.bf16.mxu0 0
    %610 = vmatmul.mubr.bf16.gmra.mrb[0].mxu0 %v406
    %v611 = vpop.f32.mrb[0].mxu0
    %v612 = vadd.f32 %v431, %v611
    %v613 = vpop.f32.mrb[0].mxu0
    %v614 = vpop.f32.mrb[0].mxu0
    %v615 = vadd.f32 %v431, %v614
    %v616 = vpop.f32.mrb[0].mxu0
    %617 = vmatprep.mubr.bf16.mxu0 0
    %618 = vmatmul.mubr.bf16.gmra.mrb[0].mxu0 %v407
    %v619 = vpop.f32.mrb[0].mxu0
    %v620 = vadd.f32 %v431, %v619
    %v621 = vpop.f32.mrb[0].mxu0
    %v622 = vpop.f32.mrb[0].mxu0
    %v623 = vadd.f32 %v431, %v622
    %v624 = vpop.f32.mrb[0].mxu0
    %625 = vmatprep.mubr.bf16.mxu0 0
    %626 = vmatmul.mubr.bf16.gmra.mrb[0].mxu0 %v408
    %v627 = vpop.f32.mrb[0].mxu0
    %v628 = vadd.f32 %v431, %v627
    %v629 = vpop.f32.mrb[0].mxu0
    %v630 = vpop.f32.mrb[0].mxu0
    %v631 = vadd.f32 %v431, %v630
    %v632 = vpop.f32.mrb[0].mxu0
    %633 = vmatprep.mubr.bf16.mxu0 0
    %634 = vmatmul.mubr.bf16.gmra.mrb[0].mxu0 %v409
    %v635 = vpop.f32.mrb[0].mxu0
    %v636 = vadd.f32 %v431, %v635
    %v637 = vpop.f32.mrb[0].mxu0
    %v638 = vpop.f32.mrb[0].mxu0
    %v639 = vadd.f32 %v431, %v638
    %v640 = vpop.f32.mrb[0].mxu0
    %641 = vdwg.mxu0
    %v642 = vmax.f32 %v516, 0.0
    %v643 = vmax.f32 %v519, 0.0
    %v644 = vmax.f32 %v524, 0.0
    %v645 = vmax.f32 %v527, 0.0
    %v646 = vmax.f32 %v532, 0.0
    %v647 = vmax.f32 %v535, 0.0
    %v648 = vmax.f32 %v540, 0.0
    %v649 = vmax.f32 %v543, 0.0
    %v650 = vmax.f32 %v548, 0.0
    %v651 = vmax.f32 %v551, 0.0
    %v652 = vmax.f32 %v556, 0.0
    %v653 = vmax.f32 %v559, 0.0
    %v654 = vmax.f32 %v564, 0.0
    %v655 = vmax.f32 %v567, 0.0
    %v656 = vmax.f32 %v572, 0.0
    %v657 = vmax.f32 %v575, 0.0
    %v658 = vmax.f32 %v580, 0.0
    %v659 = vmax.f32 %v583, 0.0
    %v660 = vmax.f32 %v588, 0.0
    %v661 = vmax.f32 %v591, 0.0
    %v662 = vmax.f32 %v596, 0.0
    %v663 = vmax.f32 %v599, 0.0
    %v664 = vmax.f32 %v604, 0.0
    %v665 = vmax.f32 %v607, 0.0
    %v666 = vmax.f32 %v612, 0.0
    %v667 = vmax.f32 %v615, 0.0
    %v668 = vmax.f32 %v620, 0.0
    %v669 = vmax.f32 %v623, 0.0
    %v670 = vmax.f32 %v628, 0.0
    %v671 = vmax.f32 %v631, 0.0
    %v672 = vmax.f32 %v636, 0.0
    %v673 = vmax.f32 %v639, 0.0
    %v674 = vpack.c.bf16 %v643, %v642
    %v675 = vpack.c.bf16 %v645, %v644
    %v676 = vpack.c.bf16 %v647, %v646
    %v677 = vpack.c.bf16 %v649, %v648
    %v678 = vpack.c.bf16 %v651, %v650
    %v679 = vpack.c.bf16 %v653, %v652
    %v680 = vpack.c.bf16 %v655, %v654
    %v681 = vpack.c.bf16 %v657, %v656
    %v682 = vpack.c.bf16 %v659, %v658
    %v683 = vpack.c.bf16 %v661, %v660
    %v684 = vpack.c.bf16 %v663, %v662
    %v685 = vpack.c.bf16 %v665, %v664
    %v686 = vpack.c.bf16 %v667, %v666
    %v687 = vpack.c.bf16 %v669, %v668
    %v688 = vpack.c.bf16 %v671, %v670
    %v689 = vpack.c.bf16 %v673, %v672
    %v690 = vld [vmem:[%s5] sm:$0xf]
    %v691 = vld [vmem:[%s5 + $0x4] sm:$0xf]
    %v692 = vld [vmem:[%s5 + $0x8] sm:$0xf]
    %v693 = vld [vmem:[%s5 + $0xc] sm:$0xf]
    %v694 = vld [vmem:[%s5 + $0x10] sm:$0xf]
    %v695 = vld [vmem:[%s5 + $0x14] sm:$0xf]
    %v696 = vld [vmem:[%s5 + $0x18] sm:$0xf]
    %v697 = vld [vmem:[%s5 + $0x1c] sm:$0xf]
    %v698 = vld [vmem:[%s5 + $0x20] sm:$0xf]
    %v699 = vld [vmem:[%s5 + $0x24] sm:$0xf]
    %v700 = vld [vmem:[%s5 + $0x28] sm:$0xf]
    %v701 = vld [vmem:[%s5 + $0x2c] sm:$0xf]
    %v702 = vld [vmem:[%s5 + $0x30] sm:$0xf]
    %v703 = vld [vmem:[%s5 + $0x34] sm:$0xf]
    %v704 = vld [vmem:[%s5 + $0x38] sm:$0xf]
    %v705 = vld [vmem:[%s5 + $0x3c] sm:$0xf]
    %v706 = vld [vmem:[%s6] sm:$0x1]
    %v708 = vlaneseq
    %v709 = vshrl.u32 %v708, 7
    %v710 = vsub.s32 0, %v709
    %v711 = vrot.slane %v706, %v710
    %v729 = vunpack.c.l.b16 %v690
    %v730 = vunpack.c.l.b16 %v691
    %v731 = vunpack.c.l.b16 %v692
    %v732 = vunpack.c.l.b16 %v693
    %v733 = vunpack.c.l.b16 %v694
    %v734 = vunpack.c.l.b16 %v695
    %v735 = vunpack.c.l.b16 %v696
    %v736 = vunpack.c.l.b16 %v697
    %v737 = vunpack.c.l.b16 %v698
    %v738 = vunpack.c.l.b16 %v699
    %v739 = vunpack.c.l.b16 %v700
    %v740 = vunpack.c.l.b16 %v701
    %v741 = vunpack.c.l.b16 %v702
    %v742 = vunpack.c.l.b16 %v703
    %v743 = vunpack.c.l.b16 %v704
    %v744 = vunpack.c.l.b16 %v705
    %v745 = vpack.c.b16 %v730, %v729
    %v746 = vpack.c.b16 %v732, %v731
    %v747 = vpack.c.b16 %v734, %v733
    %v748 = vpack.c.b16 %v736, %v735
    %v749 = vpack.c.b16 %v738, %v737
    %v750 = vpack.c.b16 %v740, %v739
    %v751 = vpack.c.b16 %v742, %v741
    %v752 = vpack.c.b16 %v744, %v743
    %761 = vmatprep.subr.bf16.mxu0 0
    %762 = vmatpush1.bf16.msra.mxu0 %v745
    %763 = vmatprep.subr.bf16.mxu0 0
    %764 = vmatpush1.bf16.msra.mxu0 %v746
    %765 = vmatprep.subr.bf16.mxu0 0
    %766 = vmatpush1.bf16.msra.mxu0 %v747
    %767 = vmatprep.subr.bf16.mxu0 0
    %768 = vmatpush1.bf16.msra.mxu0 %v748
    %769 = vmatprep.subr.bf16.mxu0 0
    %770 = vmatpush1.bf16.msra.mxu0 %v749
    %771 = vmatprep.subr.bf16.mxu0 0
    %772 = vmatpush1.bf16.msra.mxu0 %v750
    %773 = vmatprep.subr.bf16.mxu0 0
    %774 = vmatpush1.bf16.msra.mxu0 %v751
    %775 = vmatprep.subr.bf16.mxu0 0
    %776 = vmatpush1.bf16.msra.mxu0 %v752
    %777 = vmatprep.subr.bf16.mxu0 0
    %778 = vmatpush1.bf16.msra.mxu0 0
    %779 = vmatprep.subr.bf16.mxu0 0
    %780 = vmatpush1.bf16.msra.mxu0 0
    %781 = vmatprep.subr.bf16.mxu0 0
    %782 = vmatpush1.bf16.msra.mxu0 0
    %783 = vmatprep.subr.bf16.mxu0 0
    %784 = vmatpush1.bf16.msra.mxu0 0
    %785 = vmatprep.subr.bf16.mxu0 0
    %786 = vmatpush1.bf16.msra.mxu0 0
    %787 = vmatprep.subr.bf16.mxu0 0
    %788 = vmatpush1.bf16.msra.mxu0 0
    %789 = vmatprep.subr.bf16.mxu0 0
    %790 = vmatpush1.bf16.msra.mxu0 0
    %791 = vmatprep.subr.bf16.mxu0 0
    %792 = vmatpush1.bf16.msra.mxu0 0
    %793 = vmatprep.mubr.bf16.mxu0 0
    %794 = vmatmul.mubr.bf16.gmra.mrb[0].mxu0 %v674
    %v795 = vpop.f32.mrb[0].mxu0
    %v796 = vadd.f32 %v711, %v795
    %v797 = vpop.f32.mrb[0].mxu0
    %v798 = vpop.f32.mrb[0].mxu0
    %v799 = vadd.f32 %v711, %v798
    %v800 = vpop.f32.mrb[0].mxu0
    %801 = vmatprep.mubr.bf16.mxu0 0
    %802 = vmatmul.mubr.bf16.gmra.mrb[0].mxu0 %v675
    %v803 = vpop.f32.mrb[0].mxu0
    %v804 = vadd.f32 %v711, %v803
    %v805 = vpop.f32.mrb[0].mxu0
    %v806 = vpop.f32.mrb[0].mxu0
    %v807 = vadd.f32 %v711, %v806
    %v808 = vpop.f32.mrb[0].mxu0
    %809 = vmatprep.mubr.bf16.mxu0 0
    %810 = vmatmul.mubr.bf16.gmra.mrb[0].mxu0 %v676
    %v811 = vpop.f32.mrb[0].mxu0
    %v812 = vadd.f32 %v711, %v811
    %v813 = vpop.f32.mrb[0].mxu0
    %v814 = vpop.f32.mrb[0].mxu0
    %v815 = vadd.f32 %v711, %v814
    %v816 = vpop.f32.mrb[0].mxu0
    %817 = vmatprep.mubr.bf16.mxu0 0
    %818 = vmatmul.mubr.bf16.gmra.mrb[0].mxu0 %v677
    %v819 = vpop.f32.mrb[0].mxu0
    %v820 = vadd.f32 %v711, %v819
    %v821 = vpop.f32.mrb[0].mxu0
    %v822 = vpop.f32.mrb[0].mxu0
    %v823 = vadd.f32 %v711, %v822
    %v824 = vpop.f32.mrb[0].mxu0
    %825 = vmatprep.mubr.bf16.mxu0 0
    %826 = vmatmul.mubr.bf16.gmra.mrb[0].mxu0 %v678
    %v827 = vpop.f32.mrb[0].mxu0
    %v828 = vadd.f32 %v711, %v827
    %v829 = vpop.f32.mrb[0].mxu0
    %v830 = vpop.f32.mrb[0].mxu0
    %v831 = vadd.f32 %v711, %v830
    %v832 = vpop.f32.mrb[0].mxu0
    %833 = vmatprep.mubr.bf16.mxu0 0
    %834 = vmatmul.mubr.bf16.gmra.mrb[0].mxu0 %v679
    %v835 = vpop.f32.mrb[0].mxu0
    %v836 = vadd.f32 %v711, %v835
    %v837 = vpop.f32.mrb[0].mxu0
    %v838 = vpop.f32.mrb[0].mxu0
    %v839 = vadd.f32 %v711, %v838
    %v840 = vpop.f32.mrb[0].mxu0
    %841 = vmatprep.mubr.bf16.mxu0 0
    %842 = vmatmul.mubr.bf16.gmra.mrb[0].mxu0 %v680
    %v843 = vpop.f32.mrb[0].mxu0
    %v844 = vadd.f32 %v711, %v843
    %v845 = vpop.f32.mrb[0].mxu0
    %v846 = vpop.f32.mrb[0].mxu0
    %v847 = vadd.f32 %v711, %v846
    %v848 = vpop.f32.mrb[0].mxu0
    %849 = vmatprep.mubr.bf16.mxu0 0
    %850 = vmatmul.mubr.bf16.gmra.mrb[0].mxu0 %v681
    %v851 = vpop.f32.mrb[0].mxu0
    %v852 = vadd.f32 %v711, %v851
    %v853 = vpop.f32.mrb[0].mxu0
    %v854 = vpop.f32.mrb[0].mxu0
    %v855 = vadd.f32 %v711, %v854
    %v856 = vpop.f32.mrb[0].mxu0
    %857 = vmatprep.mubr.bf16.mxu0 0
    %858 = vmatmul.mubr.bf16.gmra.mrb[0].mxu0 %v682
    %v859 = vpop.f32.mrb[0].mxu0
    %v860 = vadd.f32 %v711, %v859
    %v861 = vpop.f32.mrb[0].mxu0
    %v862 = vpop.f32.mrb[0].mxu0
    %v863 = vadd.f32 %v711, %v862
    %v864 = vpop.f32.mrb[0].mxu0
    %865 = vmatprep.mubr.bf16.mxu0 0
    %866 = vmatmul.mubr.bf16.gmra.mrb[0].mxu0 %v683
    %v867 = vpop.f32.mrb[0].mxu0
    %v868 = vadd.f32 %v711, %v867
    %v869 = vpop.f32.mrb[0].mxu0
    %v870 = vpop.f32.mrb[0].mxu0
    %v871 = vadd.f32 %v711, %v870
    %v872 = vpop.f32.mrb[0].mxu0
    %873 = vmatprep.mubr.bf16.mxu0 0
    %874 = vmatmul.mubr.bf16.gmra.mrb[0].mxu0 %v684
    %v875 = vpop.f32.mrb[0].mxu0
    %v876 = vadd.f32 %v711, %v875
    %v877 = vpop.f32.mrb[0].mxu0
    %v878 = vpop.f32.mrb[0].mxu0
    %v879 = vadd.f32 %v711, %v878
    %v880 = vpop.f32.mrb[0].mxu0
    %881 = vmatprep.mubr.bf16.mxu0 0
    %882 = vmatmul.mubr.bf16.gmra.mrb[0].mxu0 %v685
    %v883 = vpop.f32.mrb[0].mxu0
    %v884 = vadd.f32 %v711, %v883
    %v885 = vpop.f32.mrb[0].mxu0
    %v886 = vpop.f32.mrb[0].mxu0
    %v887 = vadd.f32 %v711, %v886
    %v888 = vpop.f32.mrb[0].mxu0
    %889 = vmatprep.mubr.bf16.mxu0 0
    %890 = vmatmul.mubr.bf16.gmra.mrb[0].mxu0 %v686
    %v891 = vpop.f32.mrb[0].mxu0
    %v892 = vadd.f32 %v711, %v891
    %v893 = vpop.f32.mrb[0].mxu0
    %v894 = vpop.f32.mrb[0].mxu0
    %v895 = vadd.f32 %v711, %v894
    %v896 = vpop.f32.mrb[0].mxu0
    %897 = vmatprep.mubr.bf16.mxu0 0
    %898 = vmatmul.mubr.bf16.gmra.mrb[0].mxu0 %v687
    %v899 = vpop.f32.mrb[0].mxu0
    %v900 = vadd.f32 %v711, %v899
    %v901 = vpop.f32.mrb[0].mxu0
    %v902 = vpop.f32.mrb[0].mxu0
    %v903 = vadd.f32 %v711, %v902
    %v904 = vpop.f32.mrb[0].mxu0
    %905 = vmatprep.mubr.bf16.mxu0 0
    %906 = vmatmul.mubr.bf16.gmra.mrb[0].mxu0 %v688
    %v907 = vpop.f32.mrb[0].mxu0
    %v908 = vadd.f32 %v711, %v907
    %v909 = vpop.f32.mrb[0].mxu0
    %v910 = vpop.f32.mrb[0].mxu0
    %v911 = vadd.f32 %v711, %v910
    %v912 = vpop.f32.mrb[0].mxu0
    %913 = vmatprep.mubr.bf16.mxu0 0
    %914 = vmatmul.mubr.bf16.gmra.mrb[0].mxu0 %v689
    %v915 = vpop.f32.mrb[0].mxu0
    %v916 = vadd.f32 %v711, %v915
    %v917 = vpop.f32.mrb[0].mxu0
    %v918 = vpop.f32.mrb[0].mxu0
    %v919 = vadd.f32 %v711, %v918
    %v920 = vpop.f32.mrb[0].mxu0
    %921 = vdwg.mxu0
    %v922 = vlaneseq
    %v923 = vand.u32 %v922, 127
    %vm924 = vcmp.lt.s32.totalorder %v923, 4
    %v925 = vsel %vm924, %v796, -1e+30
    %v926 = vsel %vm924, %v799, -1e+30
    %v927 = vsel %vm924, %v804, -1e+30
    %v928 = vsel %vm924, %v807, -1e+30
    %v929 = vsel %vm924, %v812, -1e+30
    %v930 = vsel %vm924, %v815, -1e+30
    %v931 = vsel %vm924, %v820, -1e+30
    %v932 = vsel %vm924, %v823, -1e+30
    %v933 = vsel %vm924, %v828, -1e+30
    %v934 = vsel %vm924, %v831, -1e+30
    %v935 = vsel %vm924, %v836, -1e+30
    %v936 = vsel %vm924, %v839, -1e+30
    %v937 = vsel %vm924, %v844, -1e+30
    %v938 = vsel %vm924, %v847, -1e+30
    %v939 = vsel %vm924, %v852, -1e+30
    %v940 = vsel %vm924, %v855, -1e+30
    %v941 = vsel %vm924, %v860, -1e+30
    %v942 = vsel %vm924, %v863, -1e+30
    %v943 = vsel %vm924, %v868, -1e+30
    %v944 = vsel %vm924, %v871, -1e+30
    %v945 = vsel %vm924, %v876, -1e+30
    %v946 = vsel %vm924, %v879, -1e+30
    %v947 = vsel %vm924, %v884, -1e+30
    %v948 = vsel %vm924, %v887, -1e+30
    %v949 = vsel %vm924, %v892, -1e+30
    %v950 = vsel %vm924, %v895, -1e+30
    %v951 = vsel %vm924, %v900, -1e+30
    %v952 = vsel %vm924, %v903, -1e+30
    %v953 = vsel %vm924, %v908, -1e+30
    %v954 = vsel %vm924, %v911, -1e+30
    %v955 = vsel %vm924, %v916, -1e+30
    %v956 = vsel %vm924, %v919, -1e+30
    %957 = vmax.xlane.f32.xlu0 %v925
    %v958 = vpop.xlane.xlu0 %957
    %959 = vmax.xlane.f32.xlu0 %v926
    %v960 = vpop.xlane.xlu0 %959
    %961 = vmax.xlane.f32.xlu0 %v927
    %v962 = vpop.xlane.xlu0 %961
    %963 = vmax.xlane.f32.xlu0 %v928
    %v964 = vpop.xlane.xlu0 %963
    %965 = vmax.xlane.f32.xlu0 %v929
    %v966 = vpop.xlane.xlu0 %965
    %967 = vmax.xlane.f32.xlu0 %v930
    %v968 = vpop.xlane.xlu0 %967
    %969 = vmax.xlane.f32.xlu0 %v931
    %v970 = vpop.xlane.xlu0 %969
    %971 = vmax.xlane.f32.xlu0 %v932
    %v972 = vpop.xlane.xlu0 %971
    %973 = vmax.xlane.f32.xlu0 %v933
    %v974 = vpop.xlane.xlu0 %973
    %975 = vmax.xlane.f32.xlu0 %v934
    %v976 = vpop.xlane.xlu0 %975
    %977 = vmax.xlane.f32.xlu0 %v935
    %v978 = vpop.xlane.xlu0 %977
    %979 = vmax.xlane.f32.xlu0 %v936
    %v980 = vpop.xlane.xlu0 %979
    %981 = vmax.xlane.f32.xlu0 %v937
    %v982 = vpop.xlane.xlu0 %981
    %983 = vmax.xlane.f32.xlu0 %v938
    %v984 = vpop.xlane.xlu0 %983
    %985 = vmax.xlane.f32.xlu0 %v939
    %v986 = vpop.xlane.xlu0 %985
    %987 = vmax.xlane.f32.xlu0 %v940
    %v988 = vpop.xlane.xlu0 %987
    %989 = vmax.xlane.f32.xlu0 %v941
    %v990 = vpop.xlane.xlu0 %989
    %991 = vmax.xlane.f32.xlu0 %v942
    %v992 = vpop.xlane.xlu0 %991
    %993 = vmax.xlane.f32.xlu0 %v943
    %v994 = vpop.xlane.xlu0 %993
    %995 = vmax.xlane.f32.xlu0 %v944
    %v996 = vpop.xlane.xlu0 %995
    %997 = vmax.xlane.f32.xlu0 %v945
    %v998 = vpop.xlane.xlu0 %997
    %999 = vmax.xlane.f32.xlu0 %v946
    %v1000 = vpop.xlane.xlu0 %999
    %1001 = vmax.xlane.f32.xlu0 %v947
    %v1002 = vpop.xlane.xlu0 %1001
    %1003 = vmax.xlane.f32.xlu0 %v948
    %v1004 = vpop.xlane.xlu0 %1003
    %1005 = vmax.xlane.f32.xlu0 %v949
    %v1006 = vpop.xlane.xlu0 %1005
    %1007 = vmax.xlane.f32.xlu0 %v950
    %v1008 = vpop.xlane.xlu0 %1007
    %1009 = vmax.xlane.f32.xlu0 %v951
    %v1010 = vpop.xlane.xlu0 %1009
    %1011 = vmax.xlane.f32.xlu0 %v952
    %v1012 = vpop.xlane.xlu0 %1011
    %1013 = vmax.xlane.f32.xlu0 %v953
    %v1014 = vpop.xlane.xlu0 %1013
    %1015 = vmax.xlane.f32.xlu0 %v954
    %v1016 = vpop.xlane.xlu0 %1015
    %1017 = vmax.xlane.f32.xlu0 %v955
    %v1018 = vpop.xlane.xlu0 %1017
    %1019 = vmax.xlane.f32.xlu0 %v956
    %v1020 = vpop.xlane.xlu0 %1019
    %v1021 = vsub.f32 %v925, %v958
    %v1022 = vsub.f32 %v926, %v960
    %v1023 = vsub.f32 %v927, %v962
    %v1024 = vsub.f32 %v928, %v964
    %v1025 = vsub.f32 %v929, %v966
    %v1026 = vsub.f32 %v930, %v968
    %v1027 = vsub.f32 %v931, %v970
    %v1028 = vsub.f32 %v932, %v972
    %v1029 = vsub.f32 %v933, %v974
    %v1030 = vsub.f32 %v934, %v976
    %v1031 = vsub.f32 %v935, %v978
    %v1032 = vsub.f32 %v936, %v980
    %v1033 = vsub.f32 %v937, %v982
    %v1034 = vsub.f32 %v938, %v984
    %v1035 = vsub.f32 %v939, %v986
    %v1036 = vsub.f32 %v940, %v988
    %v1037 = vsub.f32 %v941, %v990
    %v1038 = vsub.f32 %v942, %v992
    %v1039 = vsub.f32 %v943, %v994
    %v1040 = vsub.f32 %v944, %v996
    %v1041 = vsub.f32 %v945, %v998
    %v1042 = vsub.f32 %v946, %v1000
    %v1043 = vsub.f32 %v947, %v1002
    %v1044 = vsub.f32 %v948, %v1004
    %v1045 = vsub.f32 %v949, %v1006
    %v1046 = vsub.f32 %v950, %v1008
    %v1047 = vsub.f32 %v951, %v1010
    %v1048 = vsub.f32 %v952, %v1012
    %v1049 = vsub.f32 %v953, %v1014
    %v1050 = vsub.f32 %v954, %v1016
    %v1051 = vsub.f32 %v955, %v1018
    %v1052 = vsub.f32 %v956, %v1020
    %v1053 = vmul.f32 %v1021, 1.442695
    %v1054 = vpow.pop %v1053
    %v1055 = vmul.f32 %v1022, 1.442695
    %v1056 = vpow.pop %v1055
    %v1057 = vmul.f32 %v1023, 1.442695
    %v1058 = vpow.pop %v1057
    %v1059 = vmul.f32 %v1024, 1.442695
    %v1060 = vpow.pop %v1059
    %v1061 = vmul.f32 %v1025, 1.442695
    %v1062 = vpow.pop %v1061
    %v1063 = vmul.f32 %v1026, 1.442695
    %v1064 = vpow.pop %v1063
    %v1065 = vmul.f32 %v1027, 1.442695
    %v1066 = vpow.pop %v1065
    %v1067 = vmul.f32 %v1028, 1.442695
    %v1068 = vpow.pop %v1067
    %v1069 = vmul.f32 %v1029, 1.442695
    %v1070 = vpow.pop %v1069
    %v1071 = vmul.f32 %v1030, 1.442695
    %v1072 = vpow.pop %v1071
    %v1073 = vmul.f32 %v1031, 1.442695
    %v1074 = vpow.pop %v1073
    %v1075 = vmul.f32 %v1032, 1.442695
    %v1076 = vpow.pop %v1075
    %v1077 = vmul.f32 %v1033, 1.442695
    %v1078 = vpow.pop %v1077
    %v1079 = vmul.f32 %v1034, 1.442695
    %v1080 = vpow.pop %v1079
    %v1081 = vmul.f32 %v1035, 1.442695
    %v1082 = vpow.pop %v1081
    %v1083 = vmul.f32 %v1036, 1.442695
    %v1084 = vpow.pop %v1083
    %v1085 = vmul.f32 %v1037, 1.442695
    %v1086 = vpow.pop %v1085
    %v1087 = vmul.f32 %v1038, 1.442695
    %v1088 = vpow.pop %v1087
    %v1089 = vmul.f32 %v1039, 1.442695
    %v1090 = vpow.pop %v1089
    %v1091 = vmul.f32 %v1040, 1.442695
    %v1092 = vpow.pop %v1091
    %v1093 = vmul.f32 %v1041, 1.442695
    %v1094 = vpow.pop %v1093
    %v1095 = vmul.f32 %v1042, 1.442695
    %v1096 = vpow.pop %v1095
    %v1097 = vmul.f32 %v1043, 1.442695
    %v1098 = vpow.pop %v1097
    %v1099 = vmul.f32 %v1044, 1.442695
    %v1100 = vpow.pop %v1099
    %v1101 = vmul.f32 %v1045, 1.442695
    %v1102 = vpow.pop %v1101
    %v1103 = vmul.f32 %v1046, 1.442695
    %v1104 = vpow.pop %v1103
    %v1105 = vmul.f32 %v1047, 1.442695
    %v1106 = vpow.pop %v1105
    %v1107 = vmul.f32 %v1048, 1.442695
    %v1108 = vpow.pop %v1107
    %v1109 = vmul.f32 %v1049, 1.442695
    %v1110 = vpow.pop %v1109
    %v1111 = vmul.f32 %v1050, 1.442695
    %v1112 = vpow.pop %v1111
    %v1113 = vmul.f32 %v1051, 1.442695
    %v1114 = vpow.pop %v1113
    %v1115 = vmul.f32 %v1052, 1.442695
    %v1116 = vpow.pop %v1115
    %1117 = vadd.xlane.f32.xlu0 %v1054
    %v1118 = vpop.xlane.xlu0 %1117
    %1119 = vadd.xlane.f32.xlu0 %v1056
    %v1120 = vpop.xlane.xlu0 %1119
    %1121 = vadd.xlane.f32.xlu0 %v1058
    %v1122 = vpop.xlane.xlu0 %1121
    %1123 = vadd.xlane.f32.xlu0 %v1060
    %v1124 = vpop.xlane.xlu0 %1123
    %1125 = vadd.xlane.f32.xlu0 %v1062
    %v1126 = vpop.xlane.xlu0 %1125
    %1127 = vadd.xlane.f32.xlu0 %v1064
    %v1128 = vpop.xlane.xlu0 %1127
    %1129 = vadd.xlane.f32.xlu0 %v1066
    %v1130 = vpop.xlane.xlu0 %1129
    %1131 = vadd.xlane.f32.xlu0 %v1068
    %v1132 = vpop.xlane.xlu0 %1131
    %1133 = vadd.xlane.f32.xlu0 %v1070
    %v1134 = vpop.xlane.xlu0 %1133
    %1135 = vadd.xlane.f32.xlu0 %v1072
    %v1136 = vpop.xlane.xlu0 %1135
    %1137 = vadd.xlane.f32.xlu0 %v1074
    %v1138 = vpop.xlane.xlu0 %1137
    %1139 = vadd.xlane.f32.xlu0 %v1076
    %v1140 = vpop.xlane.xlu0 %1139
    %1141 = vadd.xlane.f32.xlu0 %v1078
    %v1142 = vpop.xlane.xlu0 %1141
    %1143 = vadd.xlane.f32.xlu0 %v1080
    %v1144 = vpop.xlane.xlu0 %1143
    %1145 = vadd.xlane.f32.xlu0 %v1082
    %v1146 = vpop.xlane.xlu0 %1145
    %1147 = vadd.xlane.f32.xlu0 %v1084
    %v1148 = vpop.xlane.xlu0 %1147
    %1149 = vadd.xlane.f32.xlu0 %v1086
    %v1150 = vpop.xlane.xlu0 %1149
    %1151 = vadd.xlane.f32.xlu0 %v1088
    %v1152 = vpop.xlane.xlu0 %1151
    %1153 = vadd.xlane.f32.xlu0 %v1090
    %v1154 = vpop.xlane.xlu0 %1153
    %1155 = vadd.xlane.f32.xlu0 %v1092
    %v1156 = vpop.xlane.xlu0 %1155
    %1157 = vadd.xlane.f32.xlu0 %v1094
    %v1158 = vpop.xlane.xlu0 %1157
    %1159 = vadd.xlane.f32.xlu0 %v1096
    %v1160 = vpop.xlane.xlu0 %1159
    %1161 = vadd.xlane.f32.xlu0 %v1098
    %v1162 = vpop.xlane.xlu0 %1161
    %1163 = vadd.xlane.f32.xlu0 %v1100
    %v1164 = vpop.xlane.xlu0 %1163
    %1165 = vadd.xlane.f32.xlu0 %v1102
    %v1166 = vpop.xlane.xlu0 %1165
    %1167 = vadd.xlane.f32.xlu0 %v1104
    %v1168 = vpop.xlane.xlu0 %1167
    %1169 = vadd.xlane.f32.xlu0 %v1106
    %v1170 = vpop.xlane.xlu0 %1169
    %1171 = vadd.xlane.f32.xlu0 %v1108
    %v1172 = vpop.xlane.xlu0 %1171
    %1173 = vadd.xlane.f32.xlu0 %v1110
    %v1174 = vpop.xlane.xlu0 %1173
    %1175 = vadd.xlane.f32.xlu0 %v1112
    %v1176 = vpop.xlane.xlu0 %1175
    %1177 = vadd.xlane.f32.xlu0 %v1114
    %v1178 = vpop.xlane.xlu0 %1177
    %1179 = vadd.xlane.f32.xlu0 %v1116
    %v1180 = vpop.xlane.xlu0 %1179
    %v1181 = vrcp.pop %v1118
    %v1182 = vrcp.pop %v1120
    %v1183 = vrcp.pop %v1122
    %v1184 = vrcp.pop %v1124
    %v1185 = vrcp.pop %v1126
    %v1186 = vrcp.pop %v1128
    %v1187 = vrcp.pop %v1130
    %v1188 = vrcp.pop %v1132
    %v1189 = vrcp.pop %v1134
    %v1190 = vrcp.pop %v1136
    %v1191 = vrcp.pop %v1138
    %v1192 = vrcp.pop %v1140
    %v1193 = vrcp.pop %v1142
    %v1194 = vrcp.pop %v1144
    %v1195 = vrcp.pop %v1146
    %v1196 = vrcp.pop %v1148
    %v1197 = vrcp.pop %v1150
    %v1198 = vrcp.pop %v1152
    %v1199 = vrcp.pop %v1154
    %v1200 = vrcp.pop %v1156
    %v1201 = vrcp.pop %v1158
    %v1202 = vrcp.pop %v1160
    %v1203 = vrcp.pop %v1162
    %v1204 = vrcp.pop %v1164
    %v1205 = vrcp.pop %v1166
    %v1206 = vrcp.pop %v1168
    %v1207 = vrcp.pop %v1170
    %v1208 = vrcp.pop %v1172
    %v1209 = vrcp.pop %v1174
    %v1210 = vrcp.pop %v1176
    %v1211 = vrcp.pop %v1178
    %v1212 = vrcp.pop %v1180
    %v1213 = vmul.f32 %v1054, %v1181
    %v1214 = vmul.f32 %v1056, %v1182
    %v1215 = vmul.f32 %v1058, %v1183
    %v1216 = vmul.f32 %v1060, %v1184
    %v1217 = vmul.f32 %v1062, %v1185
    %v1218 = vmul.f32 %v1064, %v1186
    %v1219 = vmul.f32 %v1066, %v1187
    %v1220 = vmul.f32 %v1068, %v1188
    %v1221 = vmul.f32 %v1070, %v1189
    %v1222 = vmul.f32 %v1072, %v1190
    %v1223 = vmul.f32 %v1074, %v1191
    %v1224 = vmul.f32 %v1076, %v1192
    %v1225 = vmul.f32 %v1078, %v1193
    %v1226 = vmul.f32 %v1080, %v1194
    %v1227 = vmul.f32 %v1082, %v1195
    %v1228 = vmul.f32 %v1084, %v1196
    %v1229 = vmul.f32 %v1086, %v1197
    %v1230 = vmul.f32 %v1088, %v1198
    %v1231 = vmul.f32 %v1090, %v1199
    %v1232 = vmul.f32 %v1092, %v1200
    %v1233 = vmul.f32 %v1094, %v1201
    %v1234 = vmul.f32 %v1096, %v1202
    %v1235 = vmul.f32 %v1098, %v1203
    %v1236 = vmul.f32 %v1100, %v1204
    %v1237 = vmul.f32 %v1102, %v1205
    %v1238 = vmul.f32 %v1104, %v1206
    %v1239 = vmul.f32 %v1106, %v1207
    %v1240 = vmul.f32 %v1108, %v1208
    %v1241 = vmul.f32 %v1110, %v1209
    %v1242 = vmul.f32 %v1112, %v1210
    %v1243 = vmul.f32 %v1114, %v1211
    %v1244 = vmul.f32 %v1116, %v1212
    %1245 = vst [vmem:[#allocation2] sm:$0xff] %v1213
    %1246 = vst [vmem:[#allocation2 + $0x8] sm:$0xff] %v1214
    %1247 = vst [vmem:[#allocation2 + $0x10] sm:$0xff] %v1215
    %1248 = vst [vmem:[#allocation2 + $0x18] sm:$0xff] %v1216
    %1249 = vst [vmem:[#allocation2 + $0x20] sm:$0xff] %v1217
    %1250 = vst [vmem:[#allocation2 + $0x28] sm:$0xff] %v1218
    %1251 = vst [vmem:[#allocation2 + $0x30] sm:$0xff] %v1219
    %1252 = vst [vmem:[#allocation2 + $0x38] sm:$0xff] %v1220
    %1253 = vst [vmem:[#allocation2 + $0x40] sm:$0xff] %v1221
    %1254 = vst [vmem:[#allocation2 + $0x48] sm:$0xff] %v1222
    %1255 = vst [vmem:[#allocation2 + $0x50] sm:$0xff] %v1223
    %1256 = vst [vmem:[#allocation2 + $0x58] sm:$0xff] %v1224
    %1257 = vst [vmem:[#allocation2 + $0x60] sm:$0xff] %v1225
    %1258 = vst [vmem:[#allocation2 + $0x68] sm:$0xff] %v1226
    %1259 = vst [vmem:[#allocation2 + $0x70] sm:$0xff] %v1227
    %1260 = vst [vmem:[#allocation2 + $0x78] sm:$0xff] %v1228
    %1261 = vst [vmem:[#allocation2 + $0x80] sm:$0xff] %v1229
    %1262 = vst [vmem:[#allocation2 + $0x88] sm:$0xff] %v1230
    %1263 = vst [vmem:[#allocation2 + $0x90] sm:$0xff] %v1231
    %1264 = vst [vmem:[#allocation2 + $0x98] sm:$0xff] %v1232
    %1265 = vst [vmem:[#allocation2 + $0xa0] sm:$0xff] %v1233
    %1266 = vst [vmem:[#allocation2 + $0xa8] sm:$0xff] %v1234
    %1267 = vst [vmem:[#allocation2 + $0xb0] sm:$0xff] %v1235
    %1268 = vst [vmem:[#allocation2 + $0xb8] sm:$0xff] %v1236
    %1269 = vst [vmem:[#allocation2 + $0xc0] sm:$0xff] %v1237
    %1270 = vst [vmem:[#allocation2 + $0xc8] sm:$0xff] %v1238
    %1271 = vst [vmem:[#allocation2 + $0xd0] sm:$0xff] %v1239
    %1272 = vst [vmem:[#allocation2 + $0xd8] sm:$0xff] %v1240
    %1273 = vst [vmem:[#allocation2 + $0xe0] sm:$0xff] %v1241
    %1274 = vst [vmem:[#allocation2 + $0xe8] sm:$0xff] %v1242
    %1275 = vst [vmem:[#allocation2 + $0xf0] sm:$0xff] %v1243
    %1276 = vst [vmem:[#allocation2 + $0xf8] sm:$0xff] %v1244
    // Predicated region
    $region30: #{tpu_custom_call.1} parent=1 // pred_check
      _
    $region31: #{tpu_custom_call.1} parent=1 // pred_check_branch
      %1278 = sbr.rel (0) target = $region33
    $region32: #{tpu_custom_call.1} parent=1 // pred_region
      %s1280 = ssub.s32 4096, 4096
      %1281 = vsyncadd [#allocation3], %s1280
      %s1282 = sshll.u32 [#allocation2], 4
      %s1283 = int_to_ptr.vmem [resolvable:$true] %s1282
      %1288 = dma.vmem_to_hbm [thread:$0]  %s1283, 4096, %s7, [#allocation3], 128, 128, 8
    $region33: #{tpu_custom_call.1} parent=1 // pred_fallthru
      _
    // Predicated region
    $region34: #{tpu_custom_call.1} parent=1 // pred_check
      _
    $region35: #{tpu_custom_call.1} parent=1 // pred_check_branch
      %1290 = sbr.rel (0) target = $region37
    $region36: #{tpu_custom_call.1} parent=1 // pred_region
      %1291 = dma.done [#allocation3], 4096
    $region37: #{tpu_custom_call.1} parent=1 // pred_fallthru
      _
    %1292 = vsyncpa [#allocation3], 1

// kernel: tpu_custom_call.1
$region0: #{tpu_custom_call.1}
  #allocation0 [shape = 'u32[]', space=smem, size = 0x4, offset = 0x4, fixed_abs, tag = 'smem constant byte address 0x4 - core index']
  #allocation1 [shape = 'u32[144,128]{1,0:T(1,128)}', space=vmem, size = 0x12000, scoped, tag = 'internal scratch']
  %s0 = inlined_call_operand.vmem [shape: bf16[256,8], index: 0, kind: input, shape index: {}]
  %s1 = inlined_call_operand.vmem [shape: bf16[8,128], index: 1, kind: input, shape index: {}]
  %s2 = inlined_call_operand.vmem [shape: f32[1,128], index: 2, kind: input, shape index: {}]
  %s3 = inlined_call_operand.vmem [shape: bf16[128,128], index: 3, kind: input, shape index: {}]
  %s4 = inlined_call_operand.vmem [shape: f32[1,128], index: 4, kind: input, shape index: {}]
  %s5 = inlined_call_operand.vmem [shape: bf16[128,128], index: 5, kind: input, shape index: {}]
  %s6 = inlined_call_operand.vmem [shape: f32[1,128], index: 6, kind: input, shape index: {}]
  %s7 = inlined_call_operand.hbm [shape: f32[256,128], index: 7, kind: output, shape index: {}]
  %s8 = sld [smem:[#allocation0]]
  $region38: #{tpu_custom_call.1} parent=0
    _
  %s10 = ssub.s32 1, %s8
  %s11 = scalar_select 0, %s10, %s8
  $region1: #{tpu_custom_call.1} parent=0
    #allocation2 [shape = 'u8[131072]{0}', space=vmem, size = 0x20000, scoped, tag = 'output window, operand 0, single buffered']
    #allocation3 [shape = 's32[1]{0}', space=sflag, size = 0x4, scoped, tag = 'scoped memory for tpu_custom_call.1']
    %12 = vsyncpa [#allocation3], 0
    // Predicated region
    $region2: #{tpu_custom_call.1} parent=1 // pred_check
      _
    $region3: #{tpu_custom_call.1} parent=1 // pred_check_branch
      %14 = sbr.rel (0) target = $region5
    $region4: #{tpu_custom_call.1} parent=1 // pred_region
      _
    $region5: #{tpu_custom_call.1} parent=1 // pred_fallthru
      _
    // Predicated region
    $region6: #{tpu_custom_call.1} parent=1 // pred_check
      _
    $region7: #{tpu_custom_call.1} parent=1 // pred_check_branch
      %16 = sbr.rel (0) target = $region9
    $region8: #{tpu_custom_call.1} parent=1 // pred_region
      _
    $region9: #{tpu_custom_call.1} parent=1 // pred_fallthru
      _
    // Predicated region
    $region10: #{tpu_custom_call.1} parent=1 // pred_check
      _
    $region11: #{tpu_custom_call.1} parent=1 // pred_check_branch
      %18 = sbr.rel (0) target = $region13
    $region12: #{tpu_custom_call.1} parent=1 // pred_region
      _
    $region13: #{tpu_custom_call.1} parent=1 // pred_fallthru
      _
    // Predicated region
    $region14: #{tpu_custom_call.1} parent=1 // pred_check
      _
    $region15: #{tpu_custom_call.1} parent=1 // pred_check_branch
      %20 = sbr.rel (0) target = $region17
    $region16: #{tpu_custom_call.1} parent=1 // pred_region
      _
    $region17: #{tpu_custom_call.1} parent=1 // pred_fallthru
      _
    // Predicated region
    $region18: #{tpu_custom_call.1} parent=1 // pred_check
      _
    $region19: #{tpu_custom_call.1} parent=1 // pred_check_branch
      %22 = sbr.rel (0) target = $region21
    $region20: #{tpu_custom_call.1} parent=1 // pred_region
      _
    $region21: #{tpu_custom_call.1} parent=1 // pred_fallthru
      _
    // Predicated region
    $region22: #{tpu_custom_call.1} parent=1 // pred_check
      _
    $region23: #{tpu_custom_call.1} parent=1 // pred_check_branch
      %24 = sbr.rel (0) target = $region25
    $region24: #{tpu_custom_call.1} parent=1 // pred_region
      _
    $region25: #{tpu_custom_call.1} parent=1 // pred_fallthru
      _
    // Predicated region
    $region26: #{tpu_custom_call.1} parent=1 // pred_check
      _
    $region27: #{tpu_custom_call.1} parent=1 // pred_check_branch
      %26 = sbr.rel (0) target = $region29
    $region28: #{tpu_custom_call.1} parent=1 // pred_region
      _
    $region29: #{tpu_custom_call.1} parent=1 // pred_fallthru
      _
    %v28 = vld [vmem:[%s0] sm:$0xf]
    %v29 = vld [vmem:[%s0 + $0x4] sm:$0xf]
    %v30 = vld [vmem:[%s0 + $0x8] sm:$0xf]
    %v31 = vld [vmem:[%s0 + $0xc] sm:$0xf]
    %v32 = vld [vmem:[%s0 + $0x10] sm:$0xf]
    %v33 = vld [vmem:[%s0 + $0x14] sm:$0xf]
    %v34 = vld [vmem:[%s0 + $0x18] sm:$0xf]
    %v35 = vld [vmem:[%s0 + $0x1c] sm:$0xf]
    %v36 = vld [vmem:[%s0 + $0x20] sm:$0xf]
    %v37 = vld [vmem:[%s0 + $0x24] sm:$0xf]
    %v38 = vld [vmem:[%s0 + $0x28] sm:$0xf]
    %v39 = vld [vmem:[%s0 + $0x2c] sm:$0xf]
    %v40 = vld [vmem:[%s0 + $0x30] sm:$0xf]
    %v41 = vld [vmem:[%s0 + $0x34] sm:$0xf]
    %v42 = vld [vmem:[%s0 + $0x38] sm:$0xf]
    %v43 = vld [vmem:[%s0 + $0x3c] sm:$0xf]
    %v44 = vld [vmem:[%s0 + $0x40] sm:$0xf]
    %v45 = vld [vmem:[%s0 + $0x44] sm:$0xf]
    %v46 = vld [vmem:[%s0 + $0x48] sm:$0xf]
    %v47 = vld [vmem:[%s0 + $0x4c] sm:$0xf]
    %v48 = vld [vmem:[%s0 + $0x50] sm:$0xf]
    %v49 = vld [vmem:[%s0 + $0x54] sm:$0xf]
    %v50 = vld [vmem:[%s0 + $0x58] sm:$0xf]
    %v51 = vld [vmem:[%s0 + $0x5c] sm:$0xf]
    %v52 = vld [vmem:[%s0 + $0x60] sm:$0xf]
    %v53 = vld [vmem:[%s0 + $0x64] sm:$0xf]
    %v54 = vld [vmem:[%s0 + $0x68] sm:$0xf]
    %v55 = vld [vmem:[%s0 + $0x6c] sm:$0xf]
    %v56 = vld [vmem:[%s0 + $0x70] sm:$0xf]
    %v57 = vld [vmem:[%s0 + $0x74] sm:$0xf]
    %v58 = vld [vmem:[%s0 + $0x78] sm:$0xf]
    %v59 = vld [vmem:[%s0 + $0x7c] sm:$0xf]
    %v60 = vld [vmem:[%s1] sm:$0xf]
    %v61 = vld [vmem:[%s2] sm:$0x1]
    %v63 = vlaneseq
    %v64 = vshrl.u32 %v63, 7
    %v65 = vsub.s32 0, %v64
    %v66 = vrot.slane %v61, %v65
    %v100 = vunpack.c.l.b16 %v28
    %v101 = vunpack.c.l.b16 %v29
    %v102 = vunpack.c.l.b16 %v30
    %v103 = vunpack.c.l.b16 %v31
    %v104 = vunpack.c.l.b16 %v32
    %v105 = vunpack.c.l.b16 %v33
    %v106 = vunpack.c.l.b16 %v34
    %v107 = vunpack.c.l.b16 %v35
    %v108 = vunpack.c.l.b16 %v36
    %v109 = vunpack.c.l.b16 %v37
    %v110 = vunpack.c.l.b16 %v38
    %v111 = vunpack.c.l.b16 %v39
    %v112 = vunpack.c.l.b16 %v40
    %v113 = vunpack.c.l.b16 %v41
    %v114 = vunpack.c.l.b16 %v42
    %v115 = vunpack.c.l.b16 %v43
    %v116 = vunpack.c.l.b16 %v44
    %v117 = vunpack.c.l.b16 %v45
    %v118 = vunpack.c.l.b16 %v46
    %v119 = vunpack.c.l.b16 %v47
    %v120 = vunpack.c.l.b16 %v48
    %v121 = vunpack.c.l.b16 %v49
    %v122 = vunpack.c.l.b16 %v50
    %v123 = vunpack.c.l.b16 %v51
    %v124 = vunpack.c.l.b16 %v52
    %v125 = vunpack.c.l.b16 %v53
    %v126 = vunpack.c.l.b16 %v54
    %v127 = vunpack.c.l.b16 %v55
    %v128 = vunpack.c.l.b16 %v56
    %v129 = vunpack.c.l.b16 %v57
    %v130 = vunpack.c.l.b16 %v58
    %v131 = vunpack.c.l.b16 %v59
    %v132 = vpack.c.b16 %v101, %v100
    %v133 = vpack.c.b16 %v103, %v102
    %v134 = vpack.c.b16 %v105, %v104
    %v135 = vpack.c.b16 %v107, %v106
    %v136 = vpack.c.b16 %v109, %v108
    %v137 = vpack.c.b16 %v111, %v110
    %v138 = vpack.c.b16 %v113, %v112
    %v139 = vpack.c.b16 %v115, %v114
    %v140 = vpack.c.b16 %v117, %v116
    %v141 = vpack.c.b16 %v119, %v118
    %v142 = vpack.c.b16 %v121, %v120
    %v143 = vpack.c.b16 %v123, %v122
    %v144 = vpack.c.b16 %v125, %v124
    %v145 = vpack.c.b16 %v127, %v126
    %v146 = vpack.c.b16 %v129, %v128
    %v147 = vpack.c.b16 %v131, %v130
    %vm148 = vcmask 64512
    %v150 = vsel %vm148, %v132, 0
    %v153 = vsel %vm148, %v133, 0
    %v156 = vsel %vm148, %v134, 0
    %v159 = vsel %vm148, %v135, 0
    %v162 = vsel %vm148, %v136, 0
    %v165 = vsel %vm148, %v137, 0
    %v168 = vsel %vm148, %v138, 0
    %v171 = vsel %vm148, %v139, 0
    %v174 = vsel %vm148, %v140, 0
    %v177 = vsel %vm148, %v141, 0
    %v180 = vsel %vm148, %v142, 0
    %v183 = vsel %vm148, %v143, 0
    %v186 = vsel %vm148, %v144, 0
    %v189 = vsel %vm148, %v145, 0
    %v192 = vsel %vm148, %v146, 0
    %v195 = vsel %vm148, %v147, 0
    %vm197 = vcmask 1043456
    %v199 = vsel %vm197, %v60, 0
    %201 = vmatprep.subr.bf16.mxu0 0
    %202 = vmatpush1.bf16.msra.mxu0 %v199
    %203 = vmatprep.subr.bf16.mxu0 0
    %204 = vmatpush1.bf16.msra.mxu0 0
    %205 = vmatprep.subr.bf16.mxu0 0
    %206 = vmatpush1.bf16.msra.mxu0 0
    %207 = vmatprep.subr.bf16.mxu0 0
    %208 = vmatpush1.bf16.msra.mxu0 0
    %209 = vmatprep.subr.bf16.mxu0 0
    %210 = vmatpush1.bf16.msra.mxu0 0
    %211 = vmatprep.subr.bf16.mxu0 0
    %212 = vmatpush1.bf16.msra.mxu0 0
    %213 = vmatprep.subr.bf16.mxu0 0
    %214 = vmatpush1.bf16.msra.mxu0 0
    %215 = vmatprep.subr.bf16.mxu0 0
    %216 = vmatpush1.bf16.msra.mxu0 0
    %217 = vmatprep.subr.bf16.mxu0 0
    %218 = vmatpush1.bf16.msra.mxu0 0
    %219 = vmatprep.subr.bf16.mxu0 0
    %220 = vmatpush1.bf16.msra.mxu0 0
    %221 = vmatprep.subr.bf16.mxu0 0
    %222 = vmatpush1.bf16.msra.mxu0 0
    %223 = vmatprep.subr.bf16.mxu0 0
    %224 = vmatpush1.bf16.msra.mxu0 0
    %225 = vmatprep.subr.bf16.mxu0 0
    %226 = vmatpush1.bf16.msra.mxu0 0
    %227 = vmatprep.subr.bf16.mxu0 0
    %228 = vmatpush1.bf16.msra.mxu0 0
    %229 = vmatprep.subr.bf16.mxu0 0
    %230 = vmatpush1.bf16.msra.mxu0 0
    %231 = vmatprep.subr.bf16.mxu0 0
    %232 = vmatpush1.bf16.msra.mxu0 0
    %233 = vmatprep.mubr.bf16.mxu0 0
    %234 = vmatmul.mubr.bf16.gmra.mrb[0].mxu0 %v150
    %v235 = vpop.f32.mrb[0].mxu0
    %v236 = vadd.f32 %v66, %v235
    %v237 = vpop.f32.mrb[0].mxu0
    %v238 = vpop.f32.mrb[0].mxu0
    %v239 = vadd.f32 %v66, %v238
    %v240 = vpop.f32.mrb[0].mxu0
    %241 = vmatprep.mubr.bf16.mxu0 0
    %242 = vmatmul.mubr.bf16.gmra.mrb[0].mxu0 %v153
    %v243 = vpop.f32.mrb[0].mxu0
    %v244 = vadd.f32 %v66, %v243
    %v245 = vpop.f32.mrb[0].mxu0
    %v246 = vpop.f32.mrb[0].mxu0
    %v247 = vadd.f32 %v66, %v246
    %v248 = vpop.f32.mrb[0].mxu0
    %249 = vmatprep.mubr.bf16.mxu0 0
    %250 = vmatmul.mubr.bf16.gmra.mrb[0].mxu0 %v156
    %v251 = vpop.f32.mrb[0].mxu0
    %v252 = vadd.f32 %v66, %v251
    %v253 = vpop.f32.mrb[0].mxu0
    %v254 = vpop.f32.mrb[0].mxu0
    %v255 = vadd.f32 %v66, %v254
    %v256 = vpop.f32.mrb[0].mxu0
    %257 = vmatprep.mubr.bf16.mxu0 0
    %258 = vmatmul.mubr.bf16.gmra.mrb[0].mxu0 %v159
    %v259 = vpop.f32.mrb[0].mxu0
    %v260 = vadd.f32 %v66, %v259
    %v261 = vpop.f32.mrb[0].mxu0
    %v262 = vpop.f32.mrb[0].mxu0
    %v263 = vadd.f32 %v66, %v262
    %v264 = vpop.f32.mrb[0].mxu0
    %265 = vmatprep.mubr.bf16.mxu0 0
    %266 = vmatmul.mubr.bf16.gmra.mrb[0].mxu0 %v162
    %v267 = vpop.f32.mrb[0].mxu0
    %v268 = vadd.f32 %v66, %v267
    %v269 = vpop.f32.mrb[0].mxu0
    %v270 = vpop.f32.mrb[0].mxu0
    %v271 = vadd.f32 %v66, %v270
    %v272 = vpop.f32.mrb[0].mxu0
    %273 = vmatprep.mubr.bf16.mxu0 0
    %274 = vmatmul.mubr.bf16.gmra.mrb[0].mxu0 %v165
    %v275 = vpop.f32.mrb[0].mxu0
    %v276 = vadd.f32 %v66, %v275
    %v277 = vpop.f32.mrb[0].mxu0
    %v278 = vpop.f32.mrb[0].mxu0
    %v279 = vadd.f32 %v66, %v278
    %v280 = vpop.f32.mrb[0].mxu0
    %281 = vmatprep.mubr.bf16.mxu0 0
    %282 = vmatmul.mubr.bf16.gmra.mrb[0].mxu0 %v168
    %v283 = vpop.f32.mrb[0].mxu0
    %v284 = vadd.f32 %v66, %v283
    %v285 = vpop.f32.mrb[0].mxu0
    %v286 = vpop.f32.mrb[0].mxu0
    %v287 = vadd.f32 %v66, %v286
    %v288 = vpop.f32.mrb[0].mxu0
    %289 = vmatprep.mubr.bf16.mxu0 0
    %290 = vmatmul.mubr.bf16.gmra.mrb[0].mxu0 %v171
    %v291 = vpop.f32.mrb[0].mxu0
    %v292 = vadd.f32 %v66, %v291
    %v293 = vpop.f32.mrb[0].mxu0
    %v294 = vpop.f32.mrb[0].mxu0
    %v295 = vadd.f32 %v66, %v294
    %v296 = vpop.f32.mrb[0].mxu0
    %297 = vmatprep.mubr.bf16.mxu0 0
    %298 = vmatmul.mubr.bf16.gmra.mrb[0].mxu0 %v174
    %v299 = vpop.f32.mrb[0].mxu0
    %v300 = vadd.f32 %v66, %v299
    %v301 = vpop.f32.mrb[0].mxu0
    %v302 = vpop.f32.mrb[0].mxu0
    %v303 = vadd.f32 %v66, %v302
    %v304 = vpop.f32.mrb[0].mxu0
    %305 = vmatprep.mubr.bf16.mxu0 0
    %306 = vmatmul.mubr.bf16.gmra.mrb[0].mxu0 %v177
    %v307 = vpop.f32.mrb[0].mxu0
    %v308 = vadd.f32 %v66, %v307
    %v309 = vpop.f32.mrb[0].mxu0
    %v310 = vpop.f32.mrb[0].mxu0
    %v311 = vadd.f32 %v66, %v310
    %v312 = vpop.f32.mrb[0].mxu0
    %313 = vmatprep.mubr.bf16.mxu0 0
    %314 = vmatmul.mubr.bf16.gmra.mrb[0].mxu0 %v180
    %v315 = vpop.f32.mrb[0].mxu0
    %v316 = vadd.f32 %v66, %v315
    %v317 = vpop.f32.mrb[0].mxu0
    %v318 = vpop.f32.mrb[0].mxu0
    %v319 = vadd.f32 %v66, %v318
    %v320 = vpop.f32.mrb[0].mxu0
    %321 = vmatprep.mubr.bf16.mxu0 0
    %322 = vmatmul.mubr.bf16.gmra.mrb[0].mxu0 %v183
    %v323 = vpop.f32.mrb[0].mxu0
    %v324 = vadd.f32 %v66, %v323
    %v325 = vpop.f32.mrb[0].mxu0
    %v326 = vpop.f32.mrb[0].mxu0
    %v327 = vadd.f32 %v66, %v326
    %v328 = vpop.f32.mrb[0].mxu0
    %329 = vmatprep.mubr.bf16.mxu0 0
    %330 = vmatmul.mubr.bf16.gmra.mrb[0].mxu0 %v186
    %v331 = vpop.f32.mrb[0].mxu0
    %v332 = vadd.f32 %v66, %v331
    %v333 = vpop.f32.mrb[0].mxu0
    %v334 = vpop.f32.mrb[0].mxu0
    %v335 = vadd.f32 %v66, %v334
    %v336 = vpop.f32.mrb[0].mxu0
    %337 = vmatprep.mubr.bf16.mxu0 0
    %338 = vmatmul.mubr.bf16.gmra.mrb[0].mxu0 %v189
    %v339 = vpop.f32.mrb[0].mxu0
    %v340 = vadd.f32 %v66, %v339
    %v341 = vpop.f32.mrb[0].mxu0
    %v342 = vpop.f32.mrb[0].mxu0
    %v343 = vadd.f32 %v66, %v342
    %v344 = vpop.f32.mrb[0].mxu0
    %345 = vmatprep.mubr.bf16.mxu0 0
    %346 = vmatmul.mubr.bf16.gmra.mrb[0].mxu0 %v192
    %v347 = vpop.f32.mrb[0].mxu0
    %v348 = vadd.f32 %v66, %v347
    %v349 = vpop.f32.mrb[0].mxu0
    %v350 = vpop.f32.mrb[0].mxu0
    %v351 = vadd.f32 %v66, %v350
    %v352 = vpop.f32.mrb[0].mxu0
    %353 = vmatprep.mubr.bf16.mxu0 0
    %354 = vmatmul.mubr.bf16.gmra.mrb[0].mxu0 %v195
    %v355 = vpop.f32.mrb[0].mxu0
    %v356 = vadd.f32 %v66, %v355
    %v357 = vpop.f32.mrb[0].mxu0
    %v358 = vpop.f32.mrb[0].mxu0
    %v359 = vadd.f32 %v66, %v358
    %v360 = vpop.f32.mrb[0].mxu0
    %361 = vdwg.mxu0
    %v362 = vmax.f32 %v236, 0.0
    %v363 = vmax.f32 %v239, 0.0
    %v364 = vmax.f32 %v244, 0.0
    %v365 = vmax.f32 %v247, 0.0
    %v366 = vmax.f32 %v252, 0.0
    %v367 = vmax.f32 %v255, 0.0
    %v368 = vmax.f32 %v260, 0.0
    %v369 = vmax.f32 %v263, 0.0
    %v370 = vmax.f32 %v268, 0.0
    %v371 = vmax.f32 %v271, 0.0
    %v372 = vmax.f32 %v276, 0.0
    %v373 = vmax.f32 %v279, 0.0
    %v374 = vmax.f32 %v284, 0.0
    %v375 = vmax.f32 %v287, 0.0
    %v376 = vmax.f32 %v292, 0.0
    %v377 = vmax.f32 %v295, 0.0
    %v378 = vmax.f32 %v300, 0.0
    %v379 = vmax.f32 %v303, 0.0
    %v380 = vmax.f32 %v308, 0.0
    %v381 = vmax.f32 %v311, 0.0
    %v382 = vmax.f32 %v316, 0.0
    %v383 = vmax.f32 %v319, 0.0
    %v384 = vmax.f32 %v324, 0.0
    %v385 = vmax.f32 %v327, 0.0
    %v386 = vmax.f32 %v332, 0.0
    %v387 = vmax.f32 %v335, 0.0
    %v388 = vmax.f32 %v340, 0.0
    %v389 = vmax.f32 %v343, 0.0
    %v390 = vmax.f32 %v348, 0.0
    %v391 = vmax.f32 %v351, 0.0
    %v392 = vmax.f32 %v356, 0.0
    %v393 = vmax.f32 %v359, 0.0
    %v394 = vpack.c.bf16 %v363, %v362
    %v395 = vpack.c.bf16 %v365, %v364
    %v396 = vpack.c.bf16 %v367, %v366
    %v397 = vpack.c.bf16 %v369, %v368
    %v398 = vpack.c.bf16 %v371, %v370
    %v399 = vpack.c.bf16 %v373, %v372
    %v400 = vpack.c.bf16 %v375, %v374
    %v401 = vpack.c.bf16 %v377, %v376
    %v402 = vpack.c.bf16 %v379, %v378
    %v403 = vpack.c.bf16 %v381, %v380
    %v404 = vpack.c.bf16 %v383, %v382
    %v405 = vpack.c.bf16 %v385, %v384
    %v406 = vpack.c.bf16 %v387, %v386
    %v407 = vpack.c.bf16 %v389, %v388
    %v408 = vpack.c.bf16 %v391, %v390
    %v409 = vpack.c.bf16 %v393, %v392
    %v410 = vld [vmem:[%s3] sm:$0xf]
    %v411 = vld [vmem:[%s3 + $0x4] sm:$0xf]
    %v412 = vld [vmem:[%s3 + $0x8] sm:$0xf]
    %v413 = vld [vmem:[%s3 + $0xc] sm:$0xf]
    %v414 = vld [vmem:[%s3 + $0x10] sm:$0xf]
    %v415 = vld [vmem:[%s3 + $0x14] sm:$0xf]
    %v416 = vld [vmem:[%s3 + $0x18] sm:$0xf]
    %v417 = vld [vmem:[%s3 + $0x1c] sm:$0xf]
    %v418 = vld [vmem:[%s3 + $0x20] sm:$0xf]
    %v419 = vld [vmem:[%s3 + $0x24] sm:$0xf]
    %v420 = vld [vmem:[%s3 + $0x28] sm:$0xf]
    %v421 = vld [vmem:[%s3 + $0x2c] sm:$0xf]
    %v422 = vld [vmem:[%s3 + $0x30] sm:$0xf]
    %v423 = vld [vmem:[%s3 + $0x34] sm:$0xf]
    %v424 = vld [vmem:[%s3 + $0x38] sm:$0xf]
    %v425 = vld [vmem:[%s3 + $0x3c] sm:$0xf]
    %v426 = vld [vmem:[%s4] sm:$0x1]
    %v428 = vlaneseq
    %v429 = vshrl.u32 %v428, 7
    %v430 = vsub.s32 0, %v429
    %v431 = vrot.slane %v426, %v430
    %v449 = vunpack.c.l.b16 %v410
    %v450 = vunpack.c.l.b16 %v411
    %v451 = vunpack.c.l.b16 %v412
    %v452 = vunpack.c.l.b16 %v413
    %v453 = vunpack.c.l.b16 %v414
    %v454 = vunpack.c.l.b16 %v415
    %v455 = vunpack.c.l.b16 %v416
    %v456 = vunpack.c.l.b16 %v417
    %v457 = vunpack.c.l.b16 %v418
    %v458 = vunpack.c.l.b16 %v419
    %v459 = vunpack.c.l.b16 %v420
    %v460 = vunpack.c.l.b16 %v421
    %v461 = vunpack.c.l.b16 %v422
    %v462 = vunpack.c.l.b16 %v423
    %v463 = vunpack.c.l.b16 %v424
    %v464 = vunpack.c.l.b16 %v425
    %v465 = vpack.c.b16 %v450, %v449
    %v466 = vpack.c.b16 %v452, %v451
    %v467 = vpack.c.b16 %v454, %v453
    %v468 = vpack.c.b16 %v456, %v455
    %v469 = vpack.c.b16 %v458, %v457
    %v470 = vpack.c.b16 %v460, %v459
    %v471 = vpack.c.b16 %v462, %v461
    %v472 = vpack.c.b16 %v464, %v463
    %481 = vmatprep.subr.bf16.mxu0 0
    %482 = vmatpush1.bf16.msra.mxu0 %v465
    %483 = vmatprep.subr.bf16.mxu0 0
    %484 = vmatpush1.bf16.msra.mxu0 %v466
    %485 = vmatprep.subr.bf16.mxu0 0
    %486 = vmatpush1.bf16.msra.mxu0 %v467
    %487 = vmatprep.subr.bf16.mxu0 0
    %488 = vmatpush1.bf16.msra.mxu0 %v468
    %489 = vmatprep.subr.bf16.mxu0 0
    %490 = vmatpush1.bf16.msra.mxu0 %v469
    %491 = vmatprep.subr.bf16.mxu0 0
    %492 = vmatpush1.bf16.msra.mxu0 %v470
    %493 = vmatprep.subr.bf16.mxu0 0
    %494 = vmatpush1.bf16.msra.mxu0 %v471
    %495 = vmatprep.subr.bf16.mxu0 0
    %496 = vmatpush1.bf16.msra.mxu0 %v472
    %497 = vmatprep.subr.bf16.mxu0 0
    %498 = vmatpush1.bf16.msra.mxu0 0
    %499 = vmatprep.subr.bf16.mxu0 0
    %500 = vmatpush1.bf16.msra.mxu0 0
    %501 = vmatprep.subr.bf16.mxu0 0
    %502 = vmatpush1.bf16.msra.mxu0 0
    %503 = vmatprep.subr.bf16.mxu0 0
    %504 = vmatpush1.bf16.msra.mxu0 0
    %505 = vmatprep.subr.bf16.mxu0 0
    %506 = vmatpush1.bf16.msra.mxu0 0
    %507 = vmatprep.subr.bf16.mxu0 0
    %508 = vmatpush1.bf16.msra.mxu0 0
    %509 = vmatprep.subr.bf16.mxu0 0
    %510 = vmatpush1.bf16.msra.mxu0 0
    %511 = vmatprep.subr.bf16.mxu0 0
    %512 = vmatpush1.bf16.msra.mxu0 0
    %513 = vmatprep.mubr.bf16.mxu0 0
    %514 = vmatmul.mubr.bf16.gmra.mrb[0].mxu0 %v394
    %v515 = vpop.f32.mrb[0].mxu0
    %v516 = vadd.f32 %v431, %v515
    %v517 = vpop.f32.mrb[0].mxu0
    %v518 = vpop.f32.mrb[0].mxu0
    %v519 = vadd.f32 %v431, %v518
    %v520 = vpop.f32.mrb[0].mxu0
    %521 = vmatprep.mubr.bf16.mxu0 0
    %522 = vmatmul.mubr.bf16.gmra.mrb[0].mxu0 %v395
    %v523 = vpop.f32.mrb[0].mxu0
    %v524 = vadd.f32 %v431, %v523
    %v525 = vpop.f32.mrb[0].mxu0
    %v526 = vpop.f32.mrb[0].mxu0
    %v527 = vadd.f32 %v431, %v526
    %v528 = vpop.f32.mrb[0].mxu0
    %529 = vmatprep.mubr.bf16.mxu0 0
    %530 = vmatmul.mubr.bf16.gmra.mrb[0].mxu0 %v396
    %v531 = vpop.f32.mrb[0].mxu0
    %v532 = vadd.f32 %v431, %v531
    %v533 = vpop.f32.mrb[0].mxu0
    %v534 = vpop.f32.mrb[0].mxu0
    %v535 = vadd.f32 %v431, %v534
    %v536 = vpop.f32.mrb[0].mxu0
    %537 = vmatprep.mubr.bf16.mxu0 0
    %538 = vmatmul.mubr.bf16.gmra.mrb[0].mxu0 %v397
    %v539 = vpop.f32.mrb[0].mxu0
    %v540 = vadd.f32 %v431, %v539
    %v541 = vpop.f32.mrb[0].mxu0
    %v542 = vpop.f32.mrb[0].mxu0
    %v543 = vadd.f32 %v431, %v542
    %v544 = vpop.f32.mrb[0].mxu0
    %545 = vmatprep.mubr.bf16.mxu0 0
    %546 = vmatmul.mubr.bf16.gmra.mrb[0].mxu0 %v398
    %v547 = vpop.f32.mrb[0].mxu0
    %v548 = vadd.f32 %v431, %v547
    %v549 = vpop.f32.mrb[0].mxu0
    %v550 = vpop.f32.mrb[0].mxu0
    %v551 = vadd.f32 %v431, %v550
    %v552 = vpop.f32.mrb[0].mxu0
    %553 = vmatprep.mubr.bf16.mxu0 0
    %554 = vmatmul.mubr.bf16.gmra.mrb[0].mxu0 %v399
    %v555 = vpop.f32.mrb[0].mxu0
    %v556 = vadd.f32 %v431, %v555
    %v557 = vpop.f32.mrb[0].mxu0
    %v558 = vpop.f32.mrb[0].mxu0
    %v559 = vadd.f32 %v431, %v558
    %v560 = vpop.f32.mrb[0].mxu0
    %561 = vmatprep.mubr.bf16.mxu0 0
    %562 = vmatmul.mubr.bf16.gmra.mrb[0].mxu0 %v400
    %v563 = vpop.f32.mrb[0].mxu0
    %v564 = vadd.f32 %v431, %v563
    %v565 = vpop.f32.mrb[0].mxu0
    %v566 = vpop.f32.mrb[0].mxu0
    %v567 = vadd.f32 %v431, %v566
    %v568 = vpop.f32.mrb[0].mxu0
    %569 = vmatprep.mubr.bf16.mxu0 0
    %570 = vmatmul.mubr.bf16.gmra.mrb[0].mxu0 %v401
    %v571 = vpop.f32.mrb[0].mxu0
    %v572 = vadd.f32 %v431, %v571
    %v573 = vpop.f32.mrb[0].mxu0
    %v574 = vpop.f32.mrb[0].mxu0
    %v575 = vadd.f32 %v431, %v574
    %v576 = vpop.f32.mrb[0].mxu0
    %577 = vmatprep.mubr.bf16.mxu0 0
    %578 = vmatmul.mubr.bf16.gmra.mrb[0].mxu0 %v402
    %v579 = vpop.f32.mrb[0].mxu0
    %v580 = vadd.f32 %v431, %v579
    %v581 = vpop.f32.mrb[0].mxu0
    %v582 = vpop.f32.mrb[0].mxu0
    %v583 = vadd.f32 %v431, %v582
    %v584 = vpop.f32.mrb[0].mxu0
    %585 = vmatprep.mubr.bf16.mxu0 0
    %586 = vmatmul.mubr.bf16.gmra.mrb[0].mxu0 %v403
    %v587 = vpop.f32.mrb[0].mxu0
    %v588 = vadd.f32 %v431, %v587
    %v589 = vpop.f32.mrb[0].mxu0
    %v590 = vpop.f32.mrb[0].mxu0
    %v591 = vadd.f32 %v431, %v590
    %v592 = vpop.f32.mrb[0].mxu0
    %593 = vmatprep.mubr.bf16.mxu0 0
    %594 = vmatmul.mubr.bf16.gmra.mrb[0].mxu0 %v404
    %v595 = vpop.f32.mrb[0].mxu0
    %v596 = vadd.f32 %v431, %v595
    %v597 = vpop.f32.mrb[0].mxu0
    %v598 = vpop.f32.mrb[0].mxu0
    %v599 = vadd.f32 %v431, %v598
    %v600 = vpop.f32.mrb[0].mxu0
    %601 = vmatprep.mubr.bf16.mxu0 0
    %602 = vmatmul.mubr.bf16.gmra.mrb[0].mxu0 %v405
    %v603 = vpop.f32.mrb[0].mxu0
    %v604 = vadd.f32 %v431, %v603
    %v605 = vpop.f32.mrb[0].mxu0
    %v606 = vpop.f32.mrb[0].mxu0
    %v607 = vadd.f32 %v431, %v606
    %v608 = vpop.f32.mrb[0].mxu0
    %609 = vmatprep.mubr.bf16.mxu0 0
    %610 = vmatmul.mubr.bf16.gmra.mrb[0].mxu0 %v406
    %v611 = vpop.f32.mrb[0].mxu0
    %v612 = vadd.f32 %v431, %v611
    %v613 = vpop.f32.mrb[0].mxu0
    %v614 = vpop.f32.mrb[0].mxu0
    %v615 = vadd.f32 %v431, %v614
    %v616 = vpop.f32.mrb[0].mxu0
    %617 = vmatprep.mubr.bf16.mxu0 0
    %618 = vmatmul.mubr.bf16.gmra.mrb[0].mxu0 %v407
    %v619 = vpop.f32.mrb[0].mxu0
    %v620 = vadd.f32 %v431, %v619
    %v621 = vpop.f32.mrb[0].mxu0
    %v622 = vpop.f32.mrb[0].mxu0
    %v623 = vadd.f32 %v431, %v622
    %v624 = vpop.f32.mrb[0].mxu0
    %625 = vmatprep.mubr.bf16.mxu0 0
    %626 = vmatmul.mubr.bf16.gmra.mrb[0].mxu0 %v408
    %v627 = vpop.f32.mrb[0].mxu0
    %v628 = vadd.f32 %v431, %v627
    %v629 = vpop.f32.mrb[0].mxu0
    %v630 = vpop.f32.mrb[0].mxu0
    %v631 = vadd.f32 %v431, %v630
    %v632 = vpop.f32.mrb[0].mxu0
    %633 = vmatprep.mubr.bf16.mxu0 0
    %634 = vmatmul.mubr.bf16.gmra.mrb[0].mxu0 %v409
    %v635 = vpop.f32.mrb[0].mxu0
    %v636 = vadd.f32 %v431, %v635
    %v637 = vpop.f32.mrb[0].mxu0
    %v638 = vpop.f32.mrb[0].mxu0
    %v639 = vadd.f32 %v431, %v638
    %v640 = vpop.f32.mrb[0].mxu0
    %641 = vdwg.mxu0
    %v642 = vmax.f32 %v516, 0.0
    %v643 = vmax.f32 %v519, 0.0
    %v644 = vmax.f32 %v524, 0.0
    %v645 = vmax.f32 %v527, 0.0
    %v646 = vmax.f32 %v532, 0.0
    %v647 = vmax.f32 %v535, 0.0
    %v648 = vmax.f32 %v540, 0.0
    %v649 = vmax.f32 %v543, 0.0
    %v650 = vmax.f32 %v548, 0.0
    %v651 = vmax.f32 %v551, 0.0
    %v652 = vmax.f32 %v556, 0.0
    %v653 = vmax.f32 %v559, 0.0
    %v654 = vmax.f32 %v564, 0.0
    %v655 = vmax.f32 %v567, 0.0
    %v656 = vmax.f32 %v572, 0.0
    %v657 = vmax.f32 %v575, 0.0
    %v658 = vmax.f32 %v580, 0.0
    %v659 = vmax.f32 %v583, 0.0
    %v660 = vmax.f32 %v588, 0.0
    %v661 = vmax.f32 %v591, 0.0
    %v662 = vmax.f32 %v596, 0.0
    %v663 = vmax.f32 %v599, 0.0
    %v664 = vmax.f32 %v604, 0.0
    %v665 = vmax.f32 %v607, 0.0
    %v666 = vmax.f32 %v612, 0.0
    %v667 = vmax.f32 %v615, 0.0
    %v668 = vmax.f32 %v620, 0.0
    %v669 = vmax.f32 %v623, 0.0
    %v670 = vmax.f32 %v628, 0.0
    %v671 = vmax.f32 %v631, 0.0
    %v672 = vmax.f32 %v636, 0.0
    %v673 = vmax.f32 %v639, 0.0
    %v674 = vpack.c.bf16 %v643, %v642
    %v675 = vpack.c.bf16 %v645, %v644
    %v676 = vpack.c.bf16 %v647, %v646
    %v677 = vpack.c.bf16 %v649, %v648
    %v678 = vpack.c.bf16 %v651, %v650
    %v679 = vpack.c.bf16 %v653, %v652
    %v680 = vpack.c.bf16 %v655, %v654
    %v681 = vpack.c.bf16 %v657, %v656
    %v682 = vpack.c.bf16 %v659, %v658
    %v683 = vpack.c.bf16 %v661, %v660
    %v684 = vpack.c.bf16 %v663, %v662
    %v685 = vpack.c.bf16 %v665, %v664
    %v686 = vpack.c.bf16 %v667, %v666
    %v687 = vpack.c.bf16 %v669, %v668
    %v688 = vpack.c.bf16 %v671, %v670
    %v689 = vpack.c.bf16 %v673, %v672
    %v690 = vld [vmem:[%s5] sm:$0xf]
    %v691 = vld [vmem:[%s5 + $0x4] sm:$0xf]
    %v692 = vld [vmem:[%s5 + $0x8] sm:$0xf]
    %v693 = vld [vmem:[%s5 + $0xc] sm:$0xf]
    %v694 = vld [vmem:[%s5 + $0x10] sm:$0xf]
    %v695 = vld [vmem:[%s5 + $0x14] sm:$0xf]
    %v696 = vld [vmem:[%s5 + $0x18] sm:$0xf]
    %v697 = vld [vmem:[%s5 + $0x1c] sm:$0xf]
    %v698 = vld [vmem:[%s5 + $0x20] sm:$0xf]
    %v699 = vld [vmem:[%s5 + $0x24] sm:$0xf]
    %v700 = vld [vmem:[%s5 + $0x28] sm:$0xf]
    %v701 = vld [vmem:[%s5 + $0x2c] sm:$0xf]
    %v702 = vld [vmem:[%s5 + $0x30] sm:$0xf]
    %v703 = vld [vmem:[%s5 + $0x34] sm:$0xf]
    %v704 = vld [vmem:[%s5 + $0x38] sm:$0xf]
    %v705 = vld [vmem:[%s5 + $0x3c] sm:$0xf]
    %v706 = vld [vmem:[%s6] sm:$0x1]
    %v708 = vlaneseq
    %v709 = vshrl.u32 %v708, 7
    %v710 = vsub.s32 0, %v709
    %v711 = vrot.slane %v706, %v710
    %v729 = vunpack.c.l.b16 %v690
    %v730 = vunpack.c.l.b16 %v691
    %v731 = vunpack.c.l.b16 %v692
    %v732 = vunpack.c.l.b16 %v693
    %v733 = vunpack.c.l.b16 %v694
    %v734 = vunpack.c.l.b16 %v695
    %v735 = vunpack.c.l.b16 %v696
    %v736 = vunpack.c.l.b16 %v697
    %v737 = vunpack.c.l.b16 %v698
    %v738 = vunpack.c.l.b16 %v699
    %v739 = vunpack.c.l.b16 %v700
    %v740 = vunpack.c.l.b16 %v701
    %v741 = vunpack.c.l.b16 %v702
    %v742 = vunpack.c.l.b16 %v703
    %v743 = vunpack.c.l.b16 %v704
    %v744 = vunpack.c.l.b16 %v705
    %v745 = vpack.c.b16 %v730, %v729
    %v746 = vpack.c.b16 %v732, %v731
    %v747 = vpack.c.b16 %v734, %v733
    %v748 = vpack.c.b16 %v736, %v735
    %v749 = vpack.c.b16 %v738, %v737
    %v750 = vpack.c.b16 %v740, %v739
    %v751 = vpack.c.b16 %v742, %v741
    %v752 = vpack.c.b16 %v744, %v743
    %761 = vmatprep.subr.bf16.mxu0 0
    %762 = vmatpush1.bf16.msra.mxu0 %v745
    %763 = vmatprep.subr.bf16.mxu0 0
    %764 = vmatpush1.bf16.msra.mxu0 %v746
    %765 = vmatprep.subr.bf16.mxu0 0
    %766 = vmatpush1.bf16.msra.mxu0 %v747
    %767 = vmatprep.subr.bf16.mxu0 0
    %768 = vmatpush1.bf16.msra.mxu0 %v748
    %769 = vmatprep.subr.bf16.mxu0 0
    %770 = vmatpush1.bf16.msra.mxu0 %v749
    %771 = vmatprep.subr.bf16.mxu0 0
    %772 = vmatpush1.bf16.msra.mxu0 %v750
    %773 = vmatprep.subr.bf16.mxu0 0
    %774 = vmatpush1.bf16.msra.mxu0 %v751
    %775 = vmatprep.subr.bf16.mxu0 0
    %776 = vmatpush1.bf16.msra.mxu0 %v752
    %777 = vmatprep.subr.bf16.mxu0 0
    %778 = vmatpush1.bf16.msra.mxu0 0
    %779 = vmatprep.subr.bf16.mxu0 0
    %780 = vmatpush1.bf16.msra.mxu0 0
    %781 = vmatprep.subr.bf16.mxu0 0
    %782 = vmatpush1.bf16.msra.mxu0 0
    %783 = vmatprep.subr.bf16.mxu0 0
    %784 = vmatpush1.bf16.msra.mxu0 0
    %785 = vmatprep.subr.bf16.mxu0 0
    %786 = vmatpush1.bf16.msra.mxu0 0
    %787 = vmatprep.subr.bf16.mxu0 0
    %788 = vmatpush1.bf16.msra.mxu0 0
    %789 = vmatprep.subr.bf16.mxu0 0
    %790 = vmatpush1.bf16.msra.mxu0 0
    %791 = vmatprep.subr.bf16.mxu0 0
    %792 = vmatpush1.bf16.msra.mxu0 0
    %793 = vmatprep.mubr.bf16.mxu0 0
    %794 = vmatmul.mubr.bf16.gmra.mrb[0].mxu0 %v674
    %v795 = vpop.f32.mrb[0].mxu0
    %v796 = vadd.f32 %v711, %v795
    %v797 = vpop.f32.mrb[0].mxu0
    %v798 = vpop.f32.mrb[0].mxu0
    %v799 = vadd.f32 %v711, %v798
    %v800 = vpop.f32.mrb[0].mxu0
    %801 = vmatprep.mubr.bf16.mxu0 0
    %802 = vmatmul.mubr.bf16.gmra.mrb[0].mxu0 %v675
    %v803 = vpop.f32.mrb[0].mxu0
    %v804 = vadd.f32 %v711, %v803
    %v805 = vpop.f32.mrb[0].mxu0
    %v806 = vpop.f32.mrb[0].mxu0
    %v807 = vadd.f32 %v711, %v806
    %v808 = vpop.f32.mrb[0].mxu0
    %809 = vmatprep.mubr.bf16.mxu0 0
    %810 = vmatmul.mubr.bf16.gmra.mrb[0].mxu0 %v676
    %v811 = vpop.f32.mrb[0].mxu0
    %v812 = vadd.f32 %v711, %v811
    %v813 = vpop.f32.mrb[0].mxu0
    %v814 = vpop.f32.mrb[0].mxu0
    %v815 = vadd.f32 %v711, %v814
    %v816 = vpop.f32.mrb[0].mxu0
    %817 = vmatprep.mubr.bf16.mxu0 0
    %818 = vmatmul.mubr.bf16.gmra.mrb[0].mxu0 %v677
    %v819 = vpop.f32.mrb[0].mxu0
    %v820 = vadd.f32 %v711, %v819
    %v821 = vpop.f32.mrb[0].mxu0
    %v822 = vpop.f32.mrb[0].mxu0
    %v823 = vadd.f32 %v711, %v822
    %v824 = vpop.f32.mrb[0].mxu0
    %825 = vmatprep.mubr.bf16.mxu0 0
    %826 = vmatmul.mubr.bf16.gmra.mrb[0].mxu0 %v678
    %v827 = vpop.f32.mrb[0].mxu0
    %v828 = vadd.f32 %v711, %v827
    %v829 = vpop.f32.mrb[0].mxu0
    %v830 = vpop.f32.mrb[0].mxu0
    %v831 = vadd.f32 %v711, %v830
    %v832 = vpop.f32.mrb[0].mxu0
    %833 = vmatprep.mubr.bf16.mxu0 0
    %834 = vmatmul.mubr.bf16.gmra.mrb[0].mxu0 %v679
    %v835 = vpop.f32.mrb[0].mxu0
    %v836 = vadd.f32 %v711, %v835
    %v837 = vpop.f32.mrb[0].mxu0
    %v838 = vpop.f32.mrb[0].mxu0
    %v839 = vadd.f32 %v711, %v838
    %v840 = vpop.f32.mrb[0].mxu0
    %841 = vmatprep.mubr.bf16.mxu0 0
    %842 = vmatmul.mubr.bf16.gmra.mrb[0].mxu0 %v680
    %v843 = vpop.f32.mrb[0].mxu0
    %v844 = vadd.f32 %v711, %v843
    %v845 = vpop.f32.mrb[0].mxu0
    %v846 = vpop.f32.mrb[0].mxu0
    %v847 = vadd.f32 %v711, %v846
    %v848 = vpop.f32.mrb[0].mxu0
    %849 = vmatprep.mubr.bf16.mxu0 0
    %850 = vmatmul.mubr.bf16.gmra.mrb[0].mxu0 %v681
    %v851 = vpop.f32.mrb[0].mxu0
    %v852 = vadd.f32 %v711, %v851
    %v853 = vpop.f32.mrb[0].mxu0
    %v854 = vpop.f32.mrb[0].mxu0
    %v855 = vadd.f32 %v711, %v854
    %v856 = vpop.f32.mrb[0].mxu0
    %857 = vmatprep.mubr.bf16.mxu0 0
    %858 = vmatmul.mubr.bf16.gmra.mrb[0].mxu0 %v682
    %v859 = vpop.f32.mrb[0].mxu0
    %v860 = vadd.f32 %v711, %v859
    %v861 = vpop.f32.mrb[0].mxu0
    %v862 = vpop.f32.mrb[0].mxu0
    %v863 = vadd.f32 %v711, %v862
    %v864 = vpop.f32.mrb[0].mxu0
    %865 = vmatprep.mubr.bf16.mxu0 0
    %866 = vmatmul.mubr.bf16.gmra.mrb[0].mxu0 %v683
    %v867 = vpop.f32.mrb[0].mxu0
    %v868 = vadd.f32 %v711, %v867
    %v869 = vpop.f32.mrb[0].mxu0
    %v870 = vpop.f32.mrb[0].mxu0
    %v871 = vadd.f32 %v711, %v870
    %v872 = vpop.f32.mrb[0].mxu0
    %873 = vmatprep.mubr.bf16.mxu0 0
    %874 = vmatmul.mubr.bf16.gmra.mrb[0].mxu0 %v684
    %v875 = vpop.f32.mrb[0].mxu0
    %v876 = vadd.f32 %v711, %v875
    %v877 = vpop.f32.mrb[0].mxu0
    %v878 = vpop.f32.mrb[0].mxu0
    %v879 = vadd.f32 %v711, %v878
    %v880 = vpop.f32.mrb[0].mxu0
    %881 = vmatprep.mubr.bf16.mxu0 0
    %882 = vmatmul.mubr.bf16.gmra.mrb[0].mxu0 %v685
    %v883 = vpop.f32.mrb[0].mxu0
    %v884 = vadd.f32 %v711, %v883
    %v885 = vpop.f32.mrb[0].mxu0
    %v886 = vpop.f32.mrb[0].mxu0
    %v887 = vadd.f32 %v711, %v886
    %v888 = vpop.f32.mrb[0].mxu0
    %889 = vmatprep.mubr.bf16.mxu0 0
    %890 = vmatmul.mubr.bf16.gmra.mrb[0].mxu0 %v686
    %v891 = vpop.f32.mrb[0].mxu0
    %v892 = vadd.f32 %v711, %v891
    %v893 = vpop.f32.mrb[0].mxu0
    %v894 = vpop.f32.mrb[0].mxu0
    %v895 = vadd.f32 %v711, %v894
    %v896 = vpop.f32.mrb[0].mxu0
    %897 = vmatprep.mubr.bf16.mxu0 0
    %898 = vmatmul.mubr.bf16.gmra.mrb[0].mxu0 %v687
    %v899 = vpop.f32.mrb[0].mxu0
    %v900 = vadd.f32 %v711, %v899
    %v901 = vpop.f32.mrb[0].mxu0
    %v902 = vpop.f32.mrb[0].mxu0
    %v903 = vadd.f32 %v711, %v902
    %v904 = vpop.f32.mrb[0].mxu0
    %905 = vmatprep.mubr.bf16.mxu0 0
    %906 = vmatmul.mubr.bf16.gmra.mrb[0].mxu0 %v688
    %v907 = vpop.f32.mrb[0].mxu0
    %v908 = vadd.f32 %v711, %v907
    %v909 = vpop.f32.mrb[0].mxu0
    %v910 = vpop.f32.mrb[0].mxu0
    %v911 = vadd.f32 %v711, %v910
    %v912 = vpop.f32.mrb[0].mxu0
    %913 = vmatprep.mubr.bf16.mxu0 0
    %914 = vmatmul.mubr.bf16.gmra.mrb[0].mxu0 %v689
    %v915 = vpop.f32.mrb[0].mxu0
    %v916 = vadd.f32 %v711, %v915
    %v917 = vpop.f32.mrb[0].mxu0
    %v918 = vpop.f32.mrb[0].mxu0
    %v919 = vadd.f32 %v711, %v918
    %v920 = vpop.f32.mrb[0].mxu0
    %921 = vdwg.mxu0
    %v922 = vlaneseq
    %v923 = vand.u32 %v922, 127
    %vm924 = vcmp.lt.s32.totalorder %v923, 4
    %v925 = vsel %vm924, %v796, -1e+30
    %v926 = vsel %vm924, %v799, -1e+30
    %v927 = vsel %vm924, %v804, -1e+30
    %v928 = vsel %vm924, %v807, -1e+30
    %v929 = vsel %vm924, %v812, -1e+30
    %v930 = vsel %vm924, %v815, -1e+30
    %v931 = vsel %vm924, %v820, -1e+30
    %v932 = vsel %vm924, %v823, -1e+30
    %v933 = vsel %vm924, %v828, -1e+30
    %v934 = vsel %vm924, %v831, -1e+30
    %v935 = vsel %vm924, %v836, -1e+30
    %v936 = vsel %vm924, %v839, -1e+30
    %v937 = vsel %vm924, %v844, -1e+30
    %v938 = vsel %vm924, %v847, -1e+30
    %v939 = vsel %vm924, %v852, -1e+30
    %v940 = vsel %vm924, %v855, -1e+30
    %v941 = vsel %vm924, %v860, -1e+30
    %v942 = vsel %vm924, %v863, -1e+30
    %v943 = vsel %vm924, %v868, -1e+30
    %v944 = vsel %vm924, %v871, -1e+30
    %v945 = vsel %vm924, %v876, -1e+30
    %v946 = vsel %vm924, %v879, -1e+30
    %v947 = vsel %vm924, %v884, -1e+30
    %v948 = vsel %vm924, %v887, -1e+30
    %v949 = vsel %vm924, %v892, -1e+30
    %v950 = vsel %vm924, %v895, -1e+30
    %v951 = vsel %vm924, %v900, -1e+30
    %v952 = vsel %vm924, %v903, -1e+30
    %v953 = vsel %vm924, %v908, -1e+30
    %v954 = vsel %vm924, %v911, -1e+30
    %v955 = vsel %vm924, %v916, -1e+30
    %v956 = vsel %vm924, %v919, -1e+30
    %957 = vmax.xlane.f32.xlu0 %v925
    %v958 = vpop.xlane.xlu0 %957
    %959 = vmax.xlane.f32.xlu0 %v926
    %v960 = vpop.xlane.xlu0 %959
    %961 = vmax.xlane.f32.xlu0 %v927
    %v962 = vpop.xlane.xlu0 %961
    %963 = vmax.xlane.f32.xlu0 %v928
    %v964 = vpop.xlane.xlu0 %963
    %965 = vmax.xlane.f32.xlu0 %v929
    %v966 = vpop.xlane.xlu0 %965
    %967 = vmax.xlane.f32.xlu0 %v930
    %v968 = vpop.xlane.xlu0 %967
    %969 = vmax.xlane.f32.xlu0 %v931
    %v970 = vpop.xlane.xlu0 %969
    %971 = vmax.xlane.f32.xlu0 %v932
    %v972 = vpop.xlane.xlu0 %971
    %973 = vmax.xlane.f32.xlu0 %v933
    %v974 = vpop.xlane.xlu0 %973
    %975 = vmax.xlane.f32.xlu0 %v934
    %v976 = vpop.xlane.xlu0 %975
    %977 = vmax.xlane.f32.xlu0 %v935
    %v978 = vpop.xlane.xlu0 %977
    %979 = vmax.xlane.f32.xlu0 %v936
    %v980 = vpop.xlane.xlu0 %979
    %981 = vmax.xlane.f32.xlu0 %v937
    %v982 = vpop.xlane.xlu0 %981
    %983 = vmax.xlane.f32.xlu0 %v938
    %v984 = vpop.xlane.xlu0 %983
    %985 = vmax.xlane.f32.xlu0 %v939
    %v986 = vpop.xlane.xlu0 %985
    %987 = vmax.xlane.f32.xlu0 %v940
    %v988 = vpop.xlane.xlu0 %987
    %989 = vmax.xlane.f32.xlu0 %v941
    %v990 = vpop.xlane.xlu0 %989
    %991 = vmax.xlane.f32.xlu0 %v942
    %v992 = vpop.xlane.xlu0 %991
    %993 = vmax.xlane.f32.xlu0 %v943
    %v994 = vpop.xlane.xlu0 %993
    %995 = vmax.xlane.f32.xlu0 %v944
    %v996 = vpop.xlane.xlu0 %995
    %997 = vmax.xlane.f32.xlu0 %v945
    %v998 = vpop.xlane.xlu0 %997
    %999 = vmax.xlane.f32.xlu0 %v946
    %v1000 = vpop.xlane.xlu0 %999
    %1001 = vmax.xlane.f32.xlu0 %v947
    %v1002 = vpop.xlane.xlu0 %1001
    %1003 = vmax.xlane.f32.xlu0 %v948
    %v1004 = vpop.xlane.xlu0 %1003
    %1005 = vmax.xlane.f32.xlu0 %v949
    %v1006 = vpop.xlane.xlu0 %1005
    %1007 = vmax.xlane.f32.xlu0 %v950
    %v1008 = vpop.xlane.xlu0 %1007
    %1009 = vmax.xlane.f32.xlu0 %v951
    %v1010 = vpop.xlane.xlu0 %1009
    %1011 = vmax.xlane.f32.xlu0 %v952
    %v1012 = vpop.xlane.xlu0 %1011
    %1013 = vmax.xlane.f32.xlu0 %v953
    %v1014 = vpop.xlane.xlu0 %1013
    %1015 = vmax.xlane.f32.xlu0 %v954
    %v1016 = vpop.xlane.xlu0 %1015
    %1017 = vmax.xlane.f32.xlu0 %v955
    %v1018 = vpop.xlane.xlu0 %1017
    %1019 = vmax.xlane.f32.xlu0 %v956
    %v1020 = vpop.xlane.xlu0 %1019
    %v1021 = vsub.f32 %v925, %v958
    %v1022 = vsub.f32 %v926, %v960
    %v1023 = vsub.f32 %v927, %v962
    %v1024 = vsub.f32 %v928, %v964
    %v1025 = vsub.f32 %v929, %v966
    %v1026 = vsub.f32 %v930, %v968
    %v1027 = vsub.f32 %v931, %v970
    %v1028 = vsub.f32 %v932, %v972
    %v1029 = vsub.f32 %v933, %v974
    %v1030 = vsub.f32 %v934, %v976
    %v1031 = vsub.f32 %v935, %v978
    %v1032 = vsub.f32 %v936, %v980
    %v1033 = vsub.f32 %v937, %v982
    %v1034 = vsub.f32 %v938, %v984
    %v1035 = vsub.f32 %v939, %v986
    %v1036 = vsub.f32 %v940, %v988
    %v1037 = vsub.f32 %v941, %v990
    %v1038 = vsub.f32 %v942, %v992
    %v1039 = vsub.f32 %v943, %v994
    %v1040 = vsub.f32 %v944, %v996
    %v1041 = vsub.f32 %v945, %v998
    %v1042 = vsub.f32 %v946, %v1000
    %v1043 = vsub.f32 %v947, %v1002
    %v1044 = vsub.f32 %v948, %v1004
    %v1045 = vsub.f32 %v949, %v1006
    %v1046 = vsub.f32 %v950, %v1008
    %v1047 = vsub.f32 %v951, %v1010
    %v1048 = vsub.f32 %v952, %v1012
    %v1049 = vsub.f32 %v953, %v1014
    %v1050 = vsub.f32 %v954, %v1016
    %v1051 = vsub.f32 %v955, %v1018
    %v1052 = vsub.f32 %v956, %v1020
    %v1053 = vmul.f32 %v1021, 1.442695
    %v1054 = vpow.pop %v1053
    %v1055 = vmul.f32 %v1022, 1.442695
    %v1056 = vpow.pop %v1055
    %v1057 = vmul.f32 %v1023, 1.442695
    %v1058 = vpow.pop %v1057
    %v1059 = vmul.f32 %v1024, 1.442695
    %v1060 = vpow.pop %v1059
    %v1061 = vmul.f32 %v1025, 1.442695
    %v1062 = vpow.pop %v1061
    %v1063 = vmul.f32 %v1026, 1.442695
    %v1064 = vpow.pop %v1063
    %v1065 = vmul.f32 %v1027, 1.442695
    %v1066 = vpow.pop %v1065
    %v1067 = vmul.f32 %v1028, 1.442695
    %v1068 = vpow.pop %v1067
    %v1069 = vmul.f32 %v1029, 1.442695
    %v1070 = vpow.pop %v1069
    %v1071 = vmul.f32 %v1030, 1.442695
    %v1072 = vpow.pop %v1071
    %v1073 = vmul.f32 %v1031, 1.442695
    %v1074 = vpow.pop %v1073
    %v1075 = vmul.f32 %v1032, 1.442695
    %v1076 = vpow.pop %v1075
    %v1077 = vmul.f32 %v1033, 1.442695
    %v1078 = vpow.pop %v1077
    %v1079 = vmul.f32 %v1034, 1.442695
    %v1080 = vpow.pop %v1079
    %v1081 = vmul.f32 %v1035, 1.442695
    %v1082 = vpow.pop %v1081
    %v1083 = vmul.f32 %v1036, 1.442695
    %v1084 = vpow.pop %v1083
    %v1085 = vmul.f32 %v1037, 1.442695
    %v1086 = vpow.pop %v1085
    %v1087 = vmul.f32 %v1038, 1.442695
    %v1088 = vpow.pop %v1087
    %v1089 = vmul.f32 %v1039, 1.442695
    %v1090 = vpow.pop %v1089
    %v1091 = vmul.f32 %v1040, 1.442695
    %v1092 = vpow.pop %v1091
    %v1093 = vmul.f32 %v1041, 1.442695
    %v1094 = vpow.pop %v1093
    %v1095 = vmul.f32 %v1042, 1.442695
    %v1096 = vpow.pop %v1095
    %v1097 = vmul.f32 %v1043, 1.442695
    %v1098 = vpow.pop %v1097
    %v1099 = vmul.f32 %v1044, 1.442695
    %v1100 = vpow.pop %v1099
    %v1101 = vmul.f32 %v1045, 1.442695
    %v1102 = vpow.pop %v1101
    %v1103 = vmul.f32 %v1046, 1.442695
    %v1104 = vpow.pop %v1103
    %v1105 = vmul.f32 %v1047, 1.442695
    %v1106 = vpow.pop %v1105
    %v1107 = vmul.f32 %v1048, 1.442695
    %v1108 = vpow.pop %v1107
    %v1109 = vmul.f32 %v1049, 1.442695
    %v1110 = vpow.pop %v1109
    %v1111 = vmul.f32 %v1050, 1.442695
    %v1112 = vpow.pop %v1111
    %v1113 = vmul.f32 %v1051, 1.442695
    %v1114 = vpow.pop %v1113
    %v1115 = vmul.f32 %v1052, 1.442695
    %v1116 = vpow.pop %v1115
    %1117 = vadd.xlane.f32.xlu0 %v1054
    %v1118 = vpop.xlane.xlu0 %1117
    %1119 = vadd.xlane.f32.xlu0 %v1056
    %v1120 = vpop.xlane.xlu0 %1119
    %1121 = vadd.xlane.f32.xlu0 %v1058
    %v1122 = vpop.xlane.xlu0 %1121
    %1123 = vadd.xlane.f32.xlu0 %v1060
    %v1124 = vpop.xlane.xlu0 %1123
    %1125 = vadd.xlane.f32.xlu0 %v1062
    %v1126 = vpop.xlane.xlu0 %1125
    %1127 = vadd.xlane.f32.xlu0 %v1064
    %v1128 = vpop.xlane.xlu0 %1127
    %1129 = vadd.xlane.f32.xlu0 %v1066
    %v1130 = vpop.xlane.xlu0 %1129
    %1131 = vadd.xlane.f32.xlu0 %v1068
    %v1132 = vpop.xlane.xlu0 %1131
    %1133 = vadd.xlane.f32.xlu0 %v1070
    %v1134 = vpop.xlane.xlu0 %1133
    %1135 = vadd.xlane.f32.xlu0 %v1072
    %v1136 = vpop.xlane.xlu0 %1135
    %1137 = vadd.xlane.f32.xlu0 %v1074
    %v1138 = vpop.xlane.xlu0 %1137
    %1139 = vadd.xlane.f32.xlu0 %v1076
    %v1140 = vpop.xlane.xlu0 %1139
    %1141 = vadd.xlane.f32.xlu0 %v1078
    %v1142 = vpop.xlane.xlu0 %1141
    %1143 = vadd.xlane.f32.xlu0 %v1080
    %v1144 = vpop.xlane.xlu0 %1143
    %1145 = vadd.xlane.f32.xlu0 %v1082
    %v1146 = vpop.xlane.xlu0 %1145
    %1147 = vadd.xlane.f32.xlu0 %v1084
    %v1148 = vpop.xlane.xlu0 %1147
    %1149 = vadd.xlane.f32.xlu0 %v1086
    %v1150 = vpop.xlane.xlu0 %1149
    %1151 = vadd.xlane.f32.xlu0 %v1088
    %v1152 = vpop.xlane.xlu0 %1151
    %1153 = vadd.xlane.f32.xlu0 %v1090
    %v1154 = vpop.xlane.xlu0 %1153
    %1155 = vadd.xlane.f32.xlu0 %v1092
    %v1156 = vpop.xlane.xlu0 %1155
    %1157 = vadd.xlane.f32.xlu0 %v1094
    %v1158 = vpop.xlane.xlu0 %1157
    %1159 = vadd.xlane.f32.xlu0 %v1096
    %v1160 = vpop.xlane.xlu0 %1159
    %1161 = vadd.xlane.f32.xlu0 %v1098
    %v1162 = vpop.xlane.xlu0 %1161
    %1163 = vadd.xlane.f32.xlu0 %v1100
    %v1164 = vpop.xlane.xlu0 %1163
    %1165 = vadd.xlane.f32.xlu0 %v1102
    %v1166 = vpop.xlane.xlu0 %1165
    %1167 = vadd.xlane.f32.xlu0 %v1104
    %v1168 = vpop.xlane.xlu0 %1167
    %1169 = vadd.xlane.f32.xlu0 %v1106
    %v1170 = vpop.xlane.xlu0 %1169
    %1171 = vadd.xlane.f32.xlu0 %v1108
    %v1172 = vpop.xlane.xlu0 %1171
    %1173 = vadd.xlane.f32.xlu0 %v1110
    %v1174 = vpop.xlane.xlu0 %1173
    %1175 = vadd.xlane.f32.xlu0 %v1112
    %v1176 = vpop.xlane.xlu0 %1175
    %1177 = vadd.xlane.f32.xlu0 %v1114
    %v1178 = vpop.xlane.xlu0 %1177
    %1179 = vadd.xlane.f32.xlu0 %v1116
    %v1180 = vpop.xlane.xlu0 %1179
    %v1181 = vrcp.pop %v1118
    %v1182 = vrcp.pop %v1120
    %v1183 = vrcp.pop %v1122
    %v1184 = vrcp.pop %v1124
    %v1185 = vrcp.pop %v1126
    %v1186 = vrcp.pop %v1128
    %v1187 = vrcp.pop %v1130
    %v1188 = vrcp.pop %v1132
    %v1189 = vrcp.pop %v1134
    %v1190 = vrcp.pop %v1136
    %v1191 = vrcp.pop %v1138
    %v1192 = vrcp.pop %v1140
    %v1193 = vrcp.pop %v1142
    %v1194 = vrcp.pop %v1144
    %v1195 = vrcp.pop %v1146
    %v1196 = vrcp.pop %v1148
    %v1197 = vrcp.pop %v1150
    %v1198 = vrcp.pop %v1152
    %v1199 = vrcp.pop %v1154
    %v1200 = vrcp.pop %v1156
    %v1201 = vrcp.pop %v1158
    %v1202 = vrcp.pop %v1160
    %v1203 = vrcp.pop %v1162
    %v1204 = vrcp.pop %v1164
    %v1205 = vrcp.pop %v1166
    %v1206 = vrcp.pop %v1168
    %v1207 = vrcp.pop %v1170
    %v1208 = vrcp.pop %v1172
    %v1209 = vrcp.pop %v1174
    %v1210 = vrcp.pop %v1176
    %v1211 = vrcp.pop %v1178
    %v1212 = vrcp.pop %v1180
    %v1213 = vmul.f32 %v1054, %v1181
    %v1214 = vmul.f32 %v1056, %v1182
    %v1215 = vmul.f32 %v1058, %v1183
    %v1216 = vmul.f32 %v1060, %v1184
    %v1217 = vmul.f32 %v1062, %v1185
    %v1218 = vmul.f32 %v1064, %v1186
    %v1219 = vmul.f32 %v1066, %v1187
    %v1220 = vmul.f32 %v1068, %v1188
    %v1221 = vmul.f32 %v1070, %v1189
    %v1222 = vmul.f32 %v1072, %v1190
    %v1223 = vmul.f32 %v1074, %v1191
    %v1224 = vmul.f32 %v1076, %v1192
    %v1225 = vmul.f32 %v1078, %v1193
    %v1226 = vmul.f32 %v1080, %v1194
    %v1227 = vmul.f32 %v1082, %v1195
    %v1228 = vmul.f32 %v1084, %v1196
    %v1229 = vmul.f32 %v1086, %v1197
    %v1230 = vmul.f32 %v1088, %v1198
    %v1231 = vmul.f32 %v1090, %v1199
    %v1232 = vmul.f32 %v1092, %v1200
    %v1233 = vmul.f32 %v1094, %v1201
    %v1234 = vmul.f32 %v1096, %v1202
    %v1235 = vmul.f32 %v1098, %v1203
    %v1236 = vmul.f32 %v1100, %v1204
    %v1237 = vmul.f32 %v1102, %v1205
    %v1238 = vmul.f32 %v1104, %v1206
    %v1239 = vmul.f32 %v1106, %v1207
    %v1240 = vmul.f32 %v1108, %v1208
    %v1241 = vmul.f32 %v1110, %v1209
    %v1242 = vmul.f32 %v1112, %v1210
    %v1243 = vmul.f32 %v1114, %v1211
    %v1244 = vmul.f32 %v1116, %v1212
    %1245 = vst [vmem:[#allocation2] sm:$0xff] %v1213
    %1246 = vst [vmem:[#allocation2 + $0x8] sm:$0xff] %v1214
    %1247 = vst [vmem:[#allocation2 + $0x10] sm:$0xff] %v1215
    %1248 = vst [vmem:[#allocation2 + $0x18] sm:$0xff] %v1216
    %1249 = vst [vmem:[#allocation2 + $0x20] sm:$0xff] %v1217
    %1250 = vst [vmem:[#allocation2 + $0x28] sm:$0xff] %v1218
    %1251 = vst [vmem:[#allocation2 + $0x30] sm:$0xff] %v1219
    %1252 = vst [vmem:[#allocation2 + $0x38] sm:$0xff] %v1220
    %1253 = vst [vmem:[#allocation2 + $0x40] sm:$0xff] %v1221
    %1254 = vst [vmem:[#allocation2 + $0x48] sm:$0xff] %v1222
    %1255 = vst [vmem:[#allocation2 + $0x50] sm:$0xff] %v1223
    %1256 = vst [vmem:[#allocation2 + $0x58] sm:$0xff] %v1224
    %1257 = vst [vmem:[#allocation2 + $0x60] sm:$0xff] %v1225
    %1258 = vst [vmem:[#allocation2 + $0x68] sm:$0xff] %v1226
    %1259 = vst [vmem:[#allocation2 + $0x70] sm:$0xff] %v1227
    %1260 = vst [vmem:[#allocation2 + $0x78] sm:$0xff] %v1228
    %1261 = vst [vmem:[#allocation2 + $0x80] sm:$0xff] %v1229
    %1262 = vst [vmem:[#allocation2 + $0x88] sm:$0xff] %v1230
    %1263 = vst [vmem:[#allocation2 + $0x90] sm:$0xff] %v1231
    %1264 = vst [vmem:[#allocation2 + $0x98] sm:$0xff] %v1232
    %1265 = vst [vmem:[#allocation2 + $0xa0] sm:$0xff] %v1233
    %1266 = vst [vmem:[#allocation2 + $0xa8] sm:$0xff] %v1234
    %1267 = vst [vmem:[#allocation2 + $0xb0] sm:$0xff] %v1235
    %1268 = vst [vmem:[#allocation2 + $0xb8] sm:$0xff] %v1236
    %1269 = vst [vmem:[#allocation2 + $0xc0] sm:$0xff] %v1237
    %1270 = vst [vmem:[#allocation2 + $0xc8] sm:$0xff] %v1238
    %1271 = vst [vmem:[#allocation2 + $0xd0] sm:$0xff] %v1239
    %1272 = vst [vmem:[#allocation2 + $0xd8] sm:$0xff] %v1240
    %1273 = vst [vmem:[#allocation2 + $0xe0] sm:$0xff] %v1241
    %1274 = vst [vmem:[#allocation2 + $0xe8] sm:$0xff] %v1242
    %1275 = vst [vmem:[#allocation2 + $0xf0] sm:$0xff] %v1243
    %1276 = vst [vmem:[#allocation2 + $0xf8] sm:$0xff] %v1244
    // Predicated region
    $region30: #{tpu_custom_call.1} parent=1 // pred_check
      _
    $region31: #{tpu_custom_call.1} parent=1 // pred_check_branch
      %1278 = sbr.rel (0) target = $region33
    $region32: #{tpu_custom_call.1} parent=1 // pred_region
      %s1280 = ssub.s32 4096, 4096
      %1281 = vsyncadd [#allocation3], %s1280
      %s1282 = sshll.u32 [#allocation2], 4
      %s1283 = int_to_ptr.vmem [resolvable:$true] %s1282
      %1288 = dma.vmem_to_hbm [thread:$0]  %s1283, 4096, %s7, [#allocation3], 128, 128, 8
    $region33: #{tpu_custom_call.1} parent=1 // pred_fallthru
      _
    // Predicated region
    $region34: #{tpu_custom_call.1} parent=1 // pred_check
      _
    $region35: #{tpu_custom_call.1} parent=1 // pred_check_branch
      %1290 = sbr.rel (0) target = $region37
    $region36: #{tpu_custom_call.1} parent=1 // pred_region
      %1291 = dma.done [#allocation3], 4096
    $region37: #{tpu_custom_call.1} parent=1 // pred_fallthru
      _
    %1292 = vsyncpa [#allocation3], 1

</llo_original>
